<compile_context>
chip_gen: v6e
topology: v6e:2x2x1
jax: 0.10.0
libtpu: 0.0.40
codegen_flags: <defaults>
</compile_context>

<pallas_src>
import functools

import jax
import jax.numpy as jnp
from jax.experimental import pallas as pl
from jax.experimental.pallas import tpu as pltpu


# ----------------------------------------------------------------------------
# Kernels
# ----------------------------------------------------------------------------

def _tower_math(x_f32, w1, b1, w2, b2):
    """relu(x @ w1 + b1) @ w2 + b2 with bf16 operands, f32 accumulation."""
    xb = x_f32.astype(jnp.bfloat16)                       # cast in VMEM (VPU)
    h = jnp.dot(xb, w1, preferred_element_type=jnp.float32)
    h = jnp.maximum(h + b1, 0.0)
    return jnp.dot(h.astype(jnp.bfloat16), w2,
                   preferred_element_type=jnp.float32) + b2


def _siamese_fused_kernel(x0_ref, x1_ref, w1_ref, b1_ref, w2_ref, b2_ref,
                          o_ref):
    """Single invocation (v5e/v6e): both towers in one body, no grid.

    Stacked params: w1 (2,D,H) bf16, b1 (2,1,H) f32, w2 (2,H,Ep) bf16,
    b2 (2,1,Ep) f32.  Output o_ref: (2,N,Ep) f32.
    """
    o_ref[0] = _tower_math(x0_ref[...], w1_ref[0], b1_ref[0],
                           w2_ref[0], b2_ref[0]).astype(jnp.float32)
    o_ref[1] = _tower_math(x1_ref[...], w1_ref[1], b1_ref[1],
                           w2_ref[1], b2_ref[1]).astype(jnp.float32)


def _siamese_grid_kernel(x0_ref, x1_ref, w1_ref, b1_ref, w2_ref, b2_ref,
                         o_ref):
    """grid=(2,) variant (v7x): one tower per grid step / TensorCore.

    Per-tower params arrive squeezed ((D,H),(1,H),(H,Ep),(1,Ep)); the tiny
    x0/x1 blocks are DMA'd on both steps (few KiB -- noise) and the tower id
    selects which one feeds the MXU.
    """
    t = pl.program_id(0)

    @pl.when(t == 0)
    def _():
        o_ref[...] = _tower_math(x0_ref[...], w1_ref[...], b1_ref[...],
                                 w2_ref[...], b2_ref[...]).astype(jnp.float32)

    @pl.when(t == 1)
    def _():
        o_ref[...] = _tower_math(x1_ref[...], w1_ref[...], b1_ref[...],
                                 w2_ref[...], b2_ref[...]).astype(jnp.float32)


# ----------------------------------------------------------------------------
# Parameter prep -- done ONCE at init, outside the hot forward path
# ----------------------------------------------------------------------------

def _pad_last(x, target):
    pad = target - x.shape[-1]
    if pad <= 0:
        return x
    widths = [(0, 0)] * (x.ndim - 1) + [(0, pad)]
    return jnp.pad(x, widths)


def prepare_siamese_params(params_0, params_1):
    """Stack / bf16-cast / lane-pad both towers' parameters (init-time only)."""
    assert params_0["w1"].shape == params_1["w1"].shape
    assert params_0["w2"].shape == params_1["w2"].shape
    emb = params_0["w2"].shape[1]
    e_pad = max(128, ((emb + 127) // 128) * 128)          # lane-dense stores
    stacked = {
        "w1": jnp.stack([params_0["w1"], params_1["w1"]]).astype(jnp.bfloat16),
        "b1": jnp.stack([params_0["b1"], params_1["b1"]]).astype(jnp.float32),
        "w2": jnp.stack([_pad_last(params_0["w2"], e_pad),
                         _pad_last(params_1["w2"], e_pad)]).astype(jnp.bfloat16),
        "b2": jnp.stack([_pad_last(params_0["b2"], e_pad),
                         _pad_last(params_1["b2"], e_pad)]).astype(jnp.float32),
    }
    return stacked, emb


def _tensorcores_per_chip():
    """2 on v7x (tower-per-core pays off); 1 on v5e/v6e (collapse the grid)."""
    try:
        kind = jax.devices()[0].device_kind.lower()
    except Exception:
        return 1
    return 2 if "v7" in kind else 1


# ----------------------------------------------------------------------------
# Forward (hot path)
# ----------------------------------------------------------------------------

@functools.partial(jax.jit, static_argnames=("emb",))
def siamese_forward(input_0, input_1, stacked, *, emb):
    """JAX/Pallas equivalent of SiameseNetwork.forward.

    input_0, input_1: NCHW float32 arrays (same shape; symmetric towers here).
    stacked: output of prepare_siamese_params().
    Returns (embedding_0, embedding_1), each (N, emb) float32.
    """
    n = input_0.shape[0]
    assert input_1.shape[0] == n, "both towers share the batch size here"
    x0 = input_0.reshape(n, -1).astype(jnp.float32)       # torch .view(N, -1)
    x1 = input_1.reshape(n, -1).astype(jnp.float32)
    d = x0.shape[1]
    assert x1.shape[1] == d, "symmetric tower instantiation"

    hdim = stacked["w1"].shape[2]
    e_pad = stacked["w2"].shape[2]

    flops = 2 * (2 * n * d * hdim + 2 * n * hdim * e_pad)
    bytes_accessed = (2 * n * d * 4                       # x0, x1 (f32)
                      + stacked["w1"].size * 2 + stacked["w2"].size * 2
                      + stacked["b1"].size * 4 + stacked["b2"].size * 4
                      + 2 * n * e_pad * 4)                # output
    cost = pl.CostEstimate(flops=flops, transcendentals=0,
                           bytes_accessed=bytes_accessed)
    out_shape = jax.ShapeDtypeStruct((2, n, e_pad), jnp.float32)
    args = (x0, x1, stacked["w1"], stacked["b1"], stacked["w2"], stacked["b2"])

    if _tensorcores_per_chip() >= 2:
        # v7x: one tower per TensorCore; index_map splits the weight DMA
        # per core.  TODO(synk): verify Mosaic shards this grid across both
        # TCs; if not, switch to an explicit core_map / CORE_PARALLEL split.
        out = pl.pallas_call(
            _siamese_grid_kernel,
            out_shape=out_shape,
            grid=(2,),
            in_specs=[
                pl.BlockSpec((n, d), lambda t: (0, 0)),
                pl.BlockSpec((n, d), lambda t: (0, 0)),
                pl.BlockSpec((None, d, hdim), lambda t: (t, 0, 0)),
                pl.BlockSpec((None, 1, hdim), lambda t: (t, 0, 0)),
                pl.BlockSpec((None, hdim, e_pad), lambda t: (t, 0, 0)),
                pl.BlockSpec((None, 1, e_pad), lambda t: (t, 0, 0)),
            ],
            out_specs=pl.BlockSpec((None, n, e_pad), lambda t: (t, 0, 0)),
            compiler_params=pltpu.CompilerParams(
                dimension_semantics=("parallel",)),
            cost_estimate=cost,
        )(*args)
    else:
        # v5e/v6e: single TensorCore -- one invocation, both towers in the
        # body (DMA bytes identical; saves the second grid step's overhead).
        out = pl.pallas_call(
            _siamese_fused_kernel,
            out_shape=out_shape,
            cost_estimate=cost,
        )(*args)

    # Lane padding beyond `emb` comes from zero-padded w2/b2 columns; slice it
    # off (never read padded columns elsewhere).
    return out[0, :, :emb], out[1, :, :emb]


# ----------------------------------------------------------------------------
# Example / self-test
# ----------------------------------------------------------------------------

def _init_tower_params(key, in_dim, hidden_dim, emb_dim):
    k1, k2 = jax.random.split(key)
    # Deterministic, PyTorch-Linear-like scale (not a checkpoint load).
    w1 = jax.random.normal(k1, (in_dim, hidden_dim), jnp.float32) * (1.0 / jnp.sqrt(in_dim))
    b1 = jnp.zeros((1, hidden_dim), jnp.float32)
    w2 = jax.random.normal(k2, (hidden_dim, emb_dim), jnp.float32) * (1.0 / jnp.sqrt(hidden_dim))
    b2 = jnp.zeros((1, emb_dim), jnp.float32)
    return {"w1": w1, "b1": b1, "w2": w2, "b2": b2}


if __name__ == "__main__":
    # Small shapes consistent with an image-pair siamese forward.
    N, C, H, W = 2, 4, 16, 16          # NCHW inputs
    IN_DIM = C * H * W                 # 1024 after flatten
    HIDDEN = 128
    EMB = 32

    root = jax.random.PRNGKey(0)
    k_x0, k_x1, k_p0, k_p1 = jax.random.split(root, 4)

    input_0 = jax.random.normal(k_x0, (N, C, H, W), jnp.float32)
    input_1 = jax.random.normal(k_x1, (N, C, H, W), jnp.float32)

    # Two independent embedding networks (distinct weights), as in the module.
    params_0 = _init_tower_params(k_p0, IN_DIM, HIDDEN, EMB)
    params_1 = _init_tower_params(k_p1, IN_DIM, HIDDEN, EMB)

    # Hoisted weight prep: done once at init, NOT on every forward call.
    stacked, emb = prepare_siamese_params(params_0, params_1)
    stacked = jax.block_until_ready(stacked)

    emb_0, emb_1 = siamese_forward(input_0, input_1, stacked, emb=emb)
    jax.block_until_ready((emb_0, emb_1))

    # Reference matched to the kernel's precision (bf16 operands, f32 accum).
    def ref_tower_bf16(x, p):
        xb = x.reshape(x.shape[0], -1).astype(jnp.bfloat16)
        h = jnp.dot(xb, p["w1"].astype(jnp.bfloat16),
                    preferred_element_type=jnp.float32) + p["b1"]
        h = jnp.maximum(h, 0.0).astype(jnp.bfloat16)
        return jnp.dot(h, p["w2"].astype(jnp.bfloat16),
                       preferred_element_type=jnp.float32) + p["b2"]

    # Full-f32 reference of the module semantics (loose tolerance vs bf16 path).
    def ref_tower_f32(x, p):
        h = jnp.maximum(x.reshape(x.shape[0], -1) @ p["w1"] + p["b1"], 0.0)
        return h @ p["w2"] + p["b2"]

    assert emb_0.shape == (N, EMB) and emb_1.shape == (N, EMB)
    assert jnp.allclose(emb_0, ref_tower_bf16(input_0, params_0), atol=2e-3, rtol=2e-3)
    assert jnp.allclose(emb_1, ref_tower_bf16(input_1, params_1), atol=2e-3, rtol=2e-3)
    assert jnp.allclose(emb_0, ref_tower_f32(input_0, params_0), atol=5e-2, rtol=5e-2)
    assert jnp.allclose(emb_1, ref_tower_f32(input_1, params_1), atol=5e-2, rtol=5e-2)

    print("KERNEL_OK")
</pallas_src>

<mosaic_0001>
module attributes {stable_mosaic.version = 11 : i64} {
  func.func @_siamese_fused_kernel(%arg0: memref<2x1024xf32, #tpu.memory_space<vmem>>, %arg1: memref<2x1024xf32, #tpu.memory_space<vmem>>, %arg2: memref<2x1024x128xbf16, #tpu.memory_space<vmem>>, %arg3: memref<2x1x128xf32, #tpu.memory_space<vmem>>, %arg4: memref<2x128x128xbf16, #tpu.memory_space<vmem>>, %arg5: memref<2x1x128xf32, #tpu.memory_space<vmem>>, %arg6: memref<2x2x128xf32, #tpu.memory_space<vmem>>) attributes {dimension_semantics = [], scalar_prefetch = 0 : i64, scratch_operands = 0 : i64, tpu.core_type = #tpu.core_type<tc>} {
    %c0 = arith.constant 0 : index
    %c0_0 = arith.constant 0 : index
    %0 = vector.load %arg0[%c0, %c0_0] : memref<2x1024xf32, #tpu.memory_space<vmem>>, vector<2x1024xf32>
    %c0_1 = arith.constant 0 : index
    %c0_2 = arith.constant 0 : index
    %c0_3 = arith.constant 0 : index
    %1 = vector.load %arg2[%c0_1, %c0_2, %c0_3] : memref<2x1024x128xbf16, #tpu.memory_space<vmem>>, vector<1x1024x128xbf16>
    %2 = vector.shape_cast %1 : vector<1x1024x128xbf16> to vector<1024x128xbf16>
    %c0_4 = arith.constant 0 : index
    %c0_5 = arith.constant 0 : index
    %c0_6 = arith.constant 0 : index
    %3 = vector.load %arg3[%c0_4, %c0_5, %c0_6] : memref<2x1x128xf32, #tpu.memory_space<vmem>>, vector<1x1x128xf32>
    %4 = vector.shape_cast %3 : vector<1x1x128xf32> to vector<1x128xf32>
    %c0_7 = arith.constant 0 : index
    %c0_8 = arith.constant 0 : index
    %c0_9 = arith.constant 0 : index
    %5 = vector.load %arg4[%c0_7, %c0_8, %c0_9] : memref<2x128x128xbf16, #tpu.memory_space<vmem>>, vector<1x128x128xbf16>
    %6 = vector.shape_cast %5 : vector<1x128x128xbf16> to vector<128x128xbf16>
    %c0_10 = arith.constant 0 : index
    %c0_11 = arith.constant 0 : index
    %c0_12 = arith.constant 0 : index
    %7 = vector.load %arg5[%c0_10, %c0_11, %c0_12] : memref<2x1x128xf32, #tpu.memory_space<vmem>>, vector<1x1x128xf32>
    %8 = vector.shape_cast %7 : vector<1x1x128xf32> to vector<1x128xf32>
    %9 = arith.truncf %0 : vector<2x1024xf32> to vector<2x1024xbf16>
    %cst = arith.constant dense<0.000000e+00> : vector<2x128xf32>
    %10 = tpu.matmul %9, %2, %cst {dimension_numbers = #tpu.dot_dimension_numbers<[1], [0], [0], [1], [0, 0, 1, 1], [], []>} : vector<2x1024xbf16>, vector<1024x128xbf16>, vector<2x128xf32> -> vector<2x128xf32>
    %11 = vector.broadcast %4 : vector<1x128xf32> to vector<2x128xf32>
    %12 = arith.addf %10, %11 : vector<2x128xf32>
    %cst_13 = arith.constant 0.000000e+00 : f32
    %13 = vector.broadcast %cst_13 : f32 to vector<2x128xf32>
    %14 = arith.maximumf %12, %13 : vector<2x128xf32>
    %15 = arith.truncf %14 : vector<2x128xf32> to vector<2x128xbf16>
    %cst_14 = arith.constant dense<0.000000e+00> : vector<2x128xf32>
    %16 = tpu.matmul %15, %6, %cst_14 {dimension_numbers = #tpu.dot_dimension_numbers<[1], [0], [0], [1], [0, 0, 1, 1], [], []>} : vector<2x128xbf16>, vector<128x128xbf16>, vector<2x128xf32> -> vector<2x128xf32>
    %17 = vector.broadcast %8 : vector<1x128xf32> to vector<2x128xf32>
    %18 = arith.addf %16, %17 : vector<2x128xf32>
    %c0_15 = arith.constant 0 : index
    %c0_16 = arith.constant 0 : index
    %c0_17 = arith.constant 0 : index
    %19 = vector.load %arg6[%c0_15, %c0_16, %c0_17] : memref<2x2x128xf32, #tpu.memory_space<vmem>>, vector<1x2x128xf32>
    %20 = vector.shape_cast %19 : vector<1x2x128xf32> to vector<2x128xf32>
    %21 = vector.shape_cast %18 : vector<2x128xf32> to vector<1x2x128xf32>
    tpu.vector_store %arg6[%c0_15, %c0_16, %c0_17], %21 {strides = array<i32>} : memref<2x2x128xf32, #tpu.memory_space<vmem>>, vector<1x2x128xf32>,
    %c0_18 = arith.constant 0 : index
    %c0_19 = arith.constant 0 : index
    %22 = vector.load %arg1[%c0_18, %c0_19] : memref<2x1024xf32, #tpu.memory_space<vmem>>, vector<2x1024xf32>
    %c1 = arith.constant 1 : index
    %c0_20 = arith.constant 0 : index
    %c0_21 = arith.constant 0 : index
    %23 = vector.load %arg2[%c1, %c0_20, %c0_21] : memref<2x1024x128xbf16, #tpu.memory_space<vmem>>, vector<1x1024x128xbf16>
    %24 = vector.shape_cast %23 : vector<1x1024x128xbf16> to vector<1024x128xbf16>
    %c1_22 = arith.constant 1 : index
    %c0_23 = arith.constant 0 : index
    %c0_24 = arith.constant 0 : index
    %25 = vector.load %arg3[%c1_22, %c0_23, %c0_24] : memref<2x1x128xf32, #tpu.memory_space<vmem>>, vector<1x1x128xf32>
    %26 = vector.shape_cast %25 : vector<1x1x128xf32> to vector<1x128xf32>
    %c1_25 = arith.constant 1 : index
    %c0_26 = arith.constant 0 : index
    %c0_27 = arith.constant 0 : index
    %27 = vector.load %arg4[%c1_25, %c0_26, %c0_27] : memref<2x128x128xbf16, #tpu.memory_space<vmem>>, vector<1x128x128xbf16>
    %28 = vector.shape_cast %27 : vector<1x128x128xbf16> to vector<128x128xbf16>
    %c1_28 = arith.constant 1 : index
    %c0_29 = arith.constant 0 : index
    %c0_30 = arith.constant 0 : index
    %29 = vector.load %arg5[%c1_28, %c0_29, %c0_30] : memref<2x1x128xf32, #tpu.memory_space<vmem>>, vector<1x1x128xf32>
    %30 = vector.shape_cast %29 : vector<1x1x128xf32> to vector<1x128xf32>
    %31 = arith.truncf %22 : vector<2x1024xf32> to vector<2x1024xbf16>
    %cst_31 = arith.constant dense<0.000000e+00> : vector<2x128xf32>
    %32 = tpu.matmul %31, %24, %cst_31 {dimension_numbers = #tpu.dot_dimension_numbers<[1], [0], [0], [1], [0, 0, 1, 1], [], []>} : vector<2x1024xbf16>, vector<1024x128xbf16>, vector<2x128xf32> -> vector<2x128xf32>
    %33 = vector.broadcast %26 : vector<1x128xf32> to vector<2x128xf32>
    %34 = arith.addf %32, %33 : vector<2x128xf32>
    %cst_32 = arith.constant 0.000000e+00 : f32
    %35 = vector.broadcast %cst_32 : f32 to vector<2x128xf32>
    %36 = arith.maximumf %34, %35 : vector<2x128xf32>
    %37 = arith.truncf %36 : vector<2x128xf32> to vector<2x128xbf16>
    %cst_33 = arith.constant dense<0.000000e+00> : vector<2x128xf32>
    %38 = tpu.matmul %37, %28, %cst_33 {dimension_numbers = #tpu.dot_dimension_numbers<[1], [0], [0], [1], [0, 0, 1, 1], [], []>} : vector<2x128xbf16>, vector<128x128xbf16>, vector<2x128xf32> -> vector<2x128xf32>
    %39 = vector.broadcast %30 : vector<1x128xf32> to vector<2x128xf32>
    %40 = arith.addf %38, %39 : vector<2x128xf32>
    %c1_34 = arith.constant 1 : index
    %c0_35 = arith.constant 0 : index
    %c0_36 = arith.constant 0 : index
    %41 = vector.load %arg6[%c1_34, %c0_35, %c0_36] : memref<2x2x128xf32, #tpu.memory_space<vmem>>, vector<1x2x128xf32>
    %42 = vector.shape_cast %41 : vector<1x2x128xf32> to vector<2x128xf32>
    %43 = vector.shape_cast %40 : vector<2x128xf32> to vector<1x2x128xf32>
    tpu.vector_store %arg6[%c1_34, %c0_35, %c0_36], %43 {strides = array<i32>} : memref<2x2x128xf32, #tpu.memory_space<vmem>>, vector<1x2x128xf32>,
    return
  }
}

</mosaic_0001>

<llo_original>
// kernel: siamese_forward.1
$region0: #{siamese_forward.1}
  #allocation0 [shape = 'u32[]', space=smem, size = 0x4, offset = 0x4, fixed_abs, tag = 'smem constant byte address 0x4 - core index']
  #allocation1 [shape = 'u32[144,128]{1,0:T(1,128)}', space=vmem, size = 0x12000, scoped, tag = 'internal scratch']
  %s0 = inlined_call_operand.vmem [shape: f32[2,1024], index: 0, kind: input, shape index: {}]
  %s1 = inlined_call_operand.vmem [shape: f32[2,1024], index: 1, kind: input, shape index: {}]
  %s2 = inlined_call_operand.hbm [shape: bf16[2,1024,128], index: 2, kind: input, shape index: {}]
  %s3 = inlined_call_operand.vmem [shape: f32[2,1,128], index: 3, kind: input, shape index: {}]
  %s4 = inlined_call_operand.vmem [shape: bf16[2,128,128], index: 4, kind: input, shape index: {}]
  %s5 = inlined_call_operand.vmem [shape: f32[2,1,128], index: 5, kind: input, shape index: {}]
  %s6 = inlined_call_operand.vmem [shape: f32[2,2,128], index: 6, kind: output, shape index: {}]
  %s7 = sld [smem:[#allocation0]]
  $region38: #{siamese_forward.1} parent=0
    _
  %s9 = ssub.s32 1, %s7
  %s10 = scalar_select 0, %s9, %s7
  $region1: #{siamese_forward.1} parent=0
    #allocation2 [shape = 'u8[524288]{0}', space=vmem, size = 0x80000, scoped, tag = 'input window, operand 2, single buffered']
    #allocation3 [shape = 's32[1]{0}', space=sflag, size = 0x4, scoped, tag = 'scoped memory for siamese_forward.1']
    %11 = vsyncpa [#allocation3], 0
    // Predicated region
    $region2: #{siamese_forward.1} parent=1 // pred_check
      _
    $region3: #{siamese_forward.1} parent=1 // pred_check_branch
      %13 = sbr.rel (0) target = $region5
    $region4: #{siamese_forward.1} parent=1 // pred_region
      _
    $region5: #{siamese_forward.1} parent=1 // pred_fallthru
      _
    // Predicated region
    $region6: #{siamese_forward.1} parent=1 // pred_check
      _
    $region7: #{siamese_forward.1} parent=1 // pred_check_branch
      %15 = sbr.rel (0) target = $region9
    $region8: #{siamese_forward.1} parent=1 // pred_region
      _
    $region9: #{siamese_forward.1} parent=1 // pred_fallthru
      _
    // Predicated region
    $region10: #{siamese_forward.1} parent=1 // pred_check
      _
    $region11: #{siamese_forward.1} parent=1 // pred_check_branch
      %17 = sbr.rel (0) target = $region13
    $region12: #{siamese_forward.1} parent=1 // pred_region
      %s19 = ssub.s32 16384, 16384
      %20 = vsyncadd [#allocation3], %s19
      %s21 = sshll.u32 [#allocation2], 4
      %s22 = int_to_ptr.vmem [resolvable:$true] %s21
      %27 = dma.hbm_to_vmem [thread:$0]  %s2, 16384, %s22, [#allocation3], 64, 64, 4
    $region13: #{siamese_forward.1} parent=1 // pred_fallthru
      _
    // Predicated region
    $region14: #{siamese_forward.1} parent=1 // pred_check
      _
    $region15: #{siamese_forward.1} parent=1 // pred_check_branch
      %29 = sbr.rel (0) target = $region17
    $region16: #{siamese_forward.1} parent=1 // pred_region
      _
    $region17: #{siamese_forward.1} parent=1 // pred_fallthru
      _
    // Predicated region
    $region18: #{siamese_forward.1} parent=1 // pred_check
      _
    $region19: #{siamese_forward.1} parent=1 // pred_check_branch
      %31 = sbr.rel (0) target = $region21
    $region20: #{siamese_forward.1} parent=1 // pred_region
      _
    $region21: #{siamese_forward.1} parent=1 // pred_fallthru
      _
    // Predicated region
    $region22: #{siamese_forward.1} parent=1 // pred_check
      _
    $region23: #{siamese_forward.1} parent=1 // pred_check_branch
      %33 = sbr.rel (0) target = $region25
    $region24: #{siamese_forward.1} parent=1 // pred_region
      _
    $region25: #{siamese_forward.1} parent=1 // pred_fallthru
      _
    // Predicated region
    $region26: #{siamese_forward.1} parent=1 // pred_check
      _
    $region27: #{siamese_forward.1} parent=1 // pred_check_branch
      %35 = sbr.rel (0) target = $region29
    $region28: #{siamese_forward.1} parent=1 // pred_region
      %36 = dma.done [#allocation3], 16384
    $region29: #{siamese_forward.1} parent=1 // pred_fallthru
      _
    %v38 = vld [vmem:[%s0] sm:$0xff]
    %v39 = vld [vmem:[%s0 + $0x8] sm:$0xff]
    %v40 = vld [vmem:[#allocation2] sm:$0xf]
    %v41 = vld [vmem:[#allocation2 + $0x4] sm:$0xf]
    %v42 = vld [vmem:[#allocation2 + $0x8] sm:$0xf]
    %v43 = vld [vmem:[#allocation2 + $0xc] sm:$0xf]
    %v44 = vld [vmem:[#allocation2 + $0x10] sm:$0xf]
    %v45 = vld [vmem:[#allocation2 + $0x14] sm:$0xf]
    %v46 = vld [vmem:[#allocation2 + $0x18] sm:$0xf]
    %v47 = vld [vmem:[#allocation2 + $0x1c] sm:$0xf]
    %v48 = vld [vmem:[#allocation2 + $0x20] sm:$0xf]
    %v49 = vld [vmem:[#allocation2 + $0x24] sm:$0xf]
    %v50 = vld [vmem:[#allocation2 + $0x28] sm:$0xf]
    %v51 = vld [vmem:[#allocation2 + $0x2c] sm:$0xf]
    %v52 = vld [vmem:[#allocation2 + $0x30] sm:$0xf]
    %v53 = vld [vmem:[#allocation2 + $0x34] sm:$0xf]
    %v54 = vld [vmem:[#allocation2 + $0x38] sm:$0xf]
    %v55 = vld [vmem:[#allocation2 + $0x3c] sm:$0xf]
    %v56 = vld [vmem:[#allocation2 + $0x40] sm:$0xf]
    %v57 = vld [vmem:[#allocation2 + $0x44] sm:$0xf]
    %v58 = vld [vmem:[#allocation2 + $0x48] sm:$0xf]
    %v59 = vld [vmem:[#allocation2 + $0x4c] sm:$0xf]
    %v60 = vld [vmem:[#allocation2 + $0x50] sm:$0xf]
    %v61 = vld [vmem:[#allocation2 + $0x54] sm:$0xf]
    %v62 = vld [vmem:[#allocation2 + $0x58] sm:$0xf]
    %v63 = vld [vmem:[#allocation2 + $0x5c] sm:$0xf]
    %v64 = vld [vmem:[#allocation2 + $0x60] sm:$0xf]
    %v65 = vld [vmem:[#allocation2 + $0x64] sm:$0xf]
    %v66 = vld [vmem:[#allocation2 + $0x68] sm:$0xf]
    %v67 = vld [vmem:[#allocation2 + $0x6c] sm:$0xf]
    %v68 = vld [vmem:[#allocation2 + $0x70] sm:$0xf]
    %v69 = vld [vmem:[#allocation2 + $0x74] sm:$0xf]
    %v70 = vld [vmem:[#allocation2 + $0x78] sm:$0xf]
    %v71 = vld [vmem:[#allocation2 + $0x7c] sm:$0xf]
    %v72 = vld [vmem:[#allocation2 + $0x80] sm:$0xf]
    %v73 = vld [vmem:[#allocation2 + $0x84] sm:$0xf]
    %v74 = vld [vmem:[#allocation2 + $0x88] sm:$0xf]
    %v75 = vld [vmem:[#allocation2 + $0x8c] sm:$0xf]
    %v76 = vld [vmem:[#allocation2 + $0x90] sm:$0xf]
    %v77 = vld [vmem:[#allocation2 + $0x94] sm:$0xf]
    %v78 = vld [vmem:[#allocation2 + $0x98] sm:$0xf]
    %v79 = vld [vmem:[#allocation2 + $0x9c] sm:$0xf]
    %v80 = vld [vmem:[#allocation2 + $0xa0] sm:$0xf]
    %v81 = vld [vmem:[#allocation2 + $0xa4] sm:$0xf]
    %v82 = vld [vmem:[#allocation2 + $0xa8] sm:$0xf]
    %v83 = vld [vmem:[#allocation2 + $0xac] sm:$0xf]
    %v84 = vld [vmem:[#allocation2 + $0xb0] sm:$0xf]
    %v85 = vld [vmem:[#allocation2 + $0xb4] sm:$0xf]
    %v86 = vld [vmem:[#allocation2 + $0xb8] sm:$0xf]
    %v87 = vld [vmem:[#allocation2 + $0xbc] sm:$0xf]
    %v88 = vld [vmem:[#allocation2 + $0xc0] sm:$0xf]
    %v89 = vld [vmem:[#allocation2 + $0xc4] sm:$0xf]
    %v90 = vld [vmem:[#allocation2 + $0xc8] sm:$0xf]
    %v91 = vld [vmem:[#allocation2 + $0xcc] sm:$0xf]
    %v92 = vld [vmem:[#allocation2 + $0xd0] sm:$0xf]
    %v93 = vld [vmem:[#allocation2 + $0xd4] sm:$0xf]
    %v94 = vld [vmem:[#allocation2 + $0xd8] sm:$0xf]
    %v95 = vld [vmem:[#allocation2 + $0xdc] sm:$0xf]
    %v96 = vld [vmem:[#allocation2 + $0xe0] sm:$0xf]
    %v97 = vld [vmem:[#allocation2 + $0xe4] sm:$0xf]
    %v98 = vld [vmem:[#allocation2 + $0xe8] sm:$0xf]
    %v99 = vld [vmem:[#allocation2 + $0xec] sm:$0xf]
    %v100 = vld [vmem:[#allocation2 + $0xf0] sm:$0xf]
    %v101 = vld [vmem:[#allocation2 + $0xf4] sm:$0xf]
    %v102 = vld [vmem:[#allocation2 + $0xf8] sm:$0xf]
    %v103 = vld [vmem:[#allocation2 + $0xfc] sm:$0xf]
    %v104 = vld [vmem:[#allocation2 + $0x100] sm:$0xf]
    %v105 = vld [vmem:[#allocation2 + $0x104] sm:$0xf]
    %v106 = vld [vmem:[#allocation2 + $0x108] sm:$0xf]
    %v107 = vld [vmem:[#allocation2 + $0x10c] sm:$0xf]
    %v108 = vld [vmem:[#allocation2 + $0x110] sm:$0xf]
    %v109 = vld [vmem:[#allocation2 + $0x114] sm:$0xf]
    %v110 = vld [vmem:[#allocation2 + $0x118] sm:$0xf]
    %v111 = vld [vmem:[#allocation2 + $0x11c] sm:$0xf]
    %v112 = vld [vmem:[#allocation2 + $0x120] sm:$0xf]
    %v113 = vld [vmem:[#allocation2 + $0x124] sm:$0xf]
    %v114 = vld [vmem:[#allocation2 + $0x128] sm:$0xf]
    %v115 = vld [vmem:[#allocation2 + $0x12c] sm:$0xf]
    %v116 = vld [vmem:[#allocation2 + $0x130] sm:$0xf]
    %v117 = vld [vmem:[#allocation2 + $0x134] sm:$0xf]
    %v118 = vld [vmem:[#allocation2 + $0x138] sm:$0xf]
    %v119 = vld [vmem:[#allocation2 + $0x13c] sm:$0xf]
    %v120 = vld [vmem:[#allocation2 + $0x140] sm:$0xf]
    %v121 = vld [vmem:[#allocation2 + $0x144] sm:$0xf]
    %v122 = vld [vmem:[#allocation2 + $0x148] sm:$0xf]
    %v123 = vld [vmem:[#allocation2 + $0x14c] sm:$0xf]
    %v124 = vld [vmem:[#allocation2 + $0x150] sm:$0xf]
    %v125 = vld [vmem:[#allocation2 + $0x154] sm:$0xf]
    %v126 = vld [vmem:[#allocation2 + $0x158] sm:$0xf]
    %v127 = vld [vmem:[#allocation2 + $0x15c] sm:$0xf]
    %v128 = vld [vmem:[#allocation2 + $0x160] sm:$0xf]
    %v129 = vld [vmem:[#allocation2 + $0x164] sm:$0xf]
    %v130 = vld [vmem:[#allocation2 + $0x168] sm:$0xf]
    %v131 = vld [vmem:[#allocation2 + $0x16c] sm:$0xf]
    %v132 = vld [vmem:[#allocation2 + $0x170] sm:$0xf]
    %v133 = vld [vmem:[#allocation2 + $0x174] sm:$0xf]
    %v134 = vld [vmem:[#allocation2 + $0x178] sm:$0xf]
    %v135 = vld [vmem:[#allocation2 + $0x17c] sm:$0xf]
    %v136 = vld [vmem:[#allocation2 + $0x180] sm:$0xf]
    %v137 = vld [vmem:[#allocation2 + $0x184] sm:$0xf]
    %v138 = vld [vmem:[#allocation2 + $0x188] sm:$0xf]
    %v139 = vld [vmem:[#allocation2 + $0x18c] sm:$0xf]
    %v140 = vld [vmem:[#allocation2 + $0x190] sm:$0xf]
    %v141 = vld [vmem:[#allocation2 + $0x194] sm:$0xf]
    %v142 = vld [vmem:[#allocation2 + $0x198] sm:$0xf]
    %v143 = vld [vmem:[#allocation2 + $0x19c] sm:$0xf]
    %v144 = vld [vmem:[#allocation2 + $0x1a0] sm:$0xf]
    %v145 = vld [vmem:[#allocation2 + $0x1a4] sm:$0xf]
    %v146 = vld [vmem:[#allocation2 + $0x1a8] sm:$0xf]
    %v147 = vld [vmem:[#allocation2 + $0x1ac] sm:$0xf]
    %v148 = vld [vmem:[#allocation2 + $0x1b0] sm:$0xf]
    %v149 = vld [vmem:[#allocation2 + $0x1b4] sm:$0xf]
    %v150 = vld [vmem:[#allocation2 + $0x1b8] sm:$0xf]
    %v151 = vld [vmem:[#allocation2 + $0x1bc] sm:$0xf]
    %v152 = vld [vmem:[#allocation2 + $0x1c0] sm:$0xf]
    %v153 = vld [vmem:[#allocation2 + $0x1c4] sm:$0xf]
    %v154 = vld [vmem:[#allocation2 + $0x1c8] sm:$0xf]
    %v155 = vld [vmem:[#allocation2 + $0x1cc] sm:$0xf]
    %v156 = vld [vmem:[#allocation2 + $0x1d0] sm:$0xf]
    %v157 = vld [vmem:[#allocation2 + $0x1d4] sm:$0xf]
    %v158 = vld [vmem:[#allocation2 + $0x1d8] sm:$0xf]
    %v159 = vld [vmem:[#allocation2 + $0x1dc] sm:$0xf]
    %v160 = vld [vmem:[#allocation2 + $0x1e0] sm:$0xf]
    %v161 = vld [vmem:[#allocation2 + $0x1e4] sm:$0xf]
    %v162 = vld [vmem:[#allocation2 + $0x1e8] sm:$0xf]
    %v163 = vld [vmem:[#allocation2 + $0x1ec] sm:$0xf]
    %v164 = vld [vmem:[#allocation2 + $0x1f0] sm:$0xf]
    %v165 = vld [vmem:[#allocation2 + $0x1f4] sm:$0xf]
    %v166 = vld [vmem:[#allocation2 + $0x1f8] sm:$0xf]
    %v167 = vld [vmem:[#allocation2 + $0x1fc] sm:$0xf]
    %v168 = vld [vmem:[%s3] sm:$0x1]
    %v169 = vld [vmem:[%s4] sm:$0xf]
    %v170 = vld [vmem:[%s4 + $0x4] sm:$0xf]
    %v171 = vld [vmem:[%s4 + $0x8] sm:$0xf]
    %v172 = vld [vmem:[%s4 + $0xc] sm:$0xf]
    %v173 = vld [vmem:[%s4 + $0x10] sm:$0xf]
    %v174 = vld [vmem:[%s4 + $0x14] sm:$0xf]
    %v175 = vld [vmem:[%s4 + $0x18] sm:$0xf]
    %v176 = vld [vmem:[%s4 + $0x1c] sm:$0xf]
    %v177 = vld [vmem:[%s4 + $0x20] sm:$0xf]
    %v178 = vld [vmem:[%s4 + $0x24] sm:$0xf]
    %v179 = vld [vmem:[%s4 + $0x28] sm:$0xf]
    %v180 = vld [vmem:[%s4 + $0x2c] sm:$0xf]
    %v181 = vld [vmem:[%s4 + $0x30] sm:$0xf]
    %v182 = vld [vmem:[%s4 + $0x34] sm:$0xf]
    %v183 = vld [vmem:[%s4 + $0x38] sm:$0xf]
    %v184 = vld [vmem:[%s4 + $0x3c] sm:$0xf]
    %v185 = vld [vmem:[%s5] sm:$0x1]
    %v188 = vcombine.high %v38, %v38
    %v190 = vunpack.c.l.s4 1983009808
    %v191 = vunpack.c.0.s8 %v190
    %v192 = vlaneseq
    %v193 = vshrl.u32 %v192, 7
    %v194 = vsub.s32 %v191, %v193
    %v195 = vrot.slane %v38, %v194
    %v197 = vunpack.c.l.s4 1983009808
    %v198 = vunpack.c.0.s8 %v197
    %v199 = vlaneseq
    %v200 = vshrl.u32 %v199, 7
    %v201 = vsub.s32 %v198, %v200
    %v202 = vrot.slane %v188, %v201
    %v203 = vcombine.high %v195, %v195
    %v204 = vcombine.high %v202, %v202
    %v205 = vcombine.high %v39, %v39
    %v207 = vunpack.c.l.s4 1983009808
    %v208 = vunpack.c.0.s8 %v207
    %v209 = vlaneseq
    %v210 = vshrl.u32 %v209, 7
    %v211 = vsub.s32 %v208, %v210
    %v212 = vrot.slane %v39, %v211
    %v214 = vunpack.c.l.s4 1983009808
    %v215 = vunpack.c.0.s8 %v214
    %v216 = vlaneseq
    %v217 = vshrl.u32 %v216, 7
    %v218 = vsub.s32 %v215, %v217
    %v219 = vrot.slane %v205, %v218
    %v220 = vcombine.high %v212, %v212
    %v221 = vcombine.high %v219, %v219
    %v230 = vpack.c.bf16 %v195, %v195
    %v231 = vpack.c.bf16 %v203, %v203
    %v232 = vpack.c.bf16 %v202, %v202
    %v233 = vpack.c.bf16 %v204, %v204
    %v234 = vpack.c.bf16 %v212, %v212
    %v235 = vpack.c.bf16 %v220, %v220
    %v236 = vpack.c.bf16 %v219, %v219
    %v237 = vpack.c.bf16 %v221, %v221
    %v239 = vlaneseq
    %v240 = vshrl.u32 %v239, 7
    %v241 = vsub.s32 0, %v240
    %v242 = vrot.slane %v168, %v241
    %v372 = vunpack.c.l.b16 %v40
    %v373 = vunpack.c.l.b16 %v41
    %v374 = vunpack.c.l.b16 %v42
    %v375 = vunpack.c.l.b16 %v43
    %v376 = vunpack.c.l.b16 %v44
    %v377 = vunpack.c.l.b16 %v45
    %v378 = vunpack.c.l.b16 %v46
    %v379 = vunpack.c.l.b16 %v47
    %v380 = vunpack.c.l.b16 %v48
    %v381 = vunpack.c.l.b16 %v49
    %v382 = vunpack.c.l.b16 %v50
    %v383 = vunpack.c.l.b16 %v51
    %v384 = vunpack.c.l.b16 %v52
    %v385 = vunpack.c.l.b16 %v53
    %v386 = vunpack.c.l.b16 %v54
    %v387 = vunpack.c.l.b16 %v55
    %v388 = vunpack.c.l.b16 %v56
    %v389 = vunpack.c.l.b16 %v57
    %v390 = vunpack.c.l.b16 %v58
    %v391 = vunpack.c.l.b16 %v59
    %v392 = vunpack.c.l.b16 %v60
    %v393 = vunpack.c.l.b16 %v61
    %v394 = vunpack.c.l.b16 %v62
    %v395 = vunpack.c.l.b16 %v63
    %v396 = vunpack.c.l.b16 %v64
    %v397 = vunpack.c.l.b16 %v65
    %v398 = vunpack.c.l.b16 %v66
    %v399 = vunpack.c.l.b16 %v67
    %v400 = vunpack.c.l.b16 %v68
    %v401 = vunpack.c.l.b16 %v69
    %v402 = vunpack.c.l.b16 %v70
    %v403 = vunpack.c.l.b16 %v71
    %v404 = vunpack.c.l.b16 %v72
    %v405 = vunpack.c.l.b16 %v73
    %v406 = vunpack.c.l.b16 %v74
    %v407 = vunpack.c.l.b16 %v75
    %v408 = vunpack.c.l.b16 %v76
    %v409 = vunpack.c.l.b16 %v77
    %v410 = vunpack.c.l.b16 %v78
    %v411 = vunpack.c.l.b16 %v79
    %v412 = vunpack.c.l.b16 %v80
    %v413 = vunpack.c.l.b16 %v81
    %v414 = vunpack.c.l.b16 %v82
    %v415 = vunpack.c.l.b16 %v83
    %v416 = vunpack.c.l.b16 %v84
    %v417 = vunpack.c.l.b16 %v85
    %v418 = vunpack.c.l.b16 %v86
    %v419 = vunpack.c.l.b16 %v87
    %v420 = vunpack.c.l.b16 %v88
    %v421 = vunpack.c.l.b16 %v89
    %v422 = vunpack.c.l.b16 %v90
    %v423 = vunpack.c.l.b16 %v91
    %v424 = vunpack.c.l.b16 %v92
    %v425 = vunpack.c.l.b16 %v93
    %v426 = vunpack.c.l.b16 %v94
    %v427 = vunpack.c.l.b16 %v95
    %v428 = vunpack.c.l.b16 %v96
    %v429 = vunpack.c.l.b16 %v97
    %v430 = vunpack.c.l.b16 %v98
    %v431 = vunpack.c.l.b16 %v99
    %v432 = vunpack.c.l.b16 %v100
    %v433 = vunpack.c.l.b16 %v101
    %v434 = vunpack.c.l.b16 %v102
    %v435 = vunpack.c.l.b16 %v103
    %v436 = vunpack.c.l.b16 %v104
    %v437 = vunpack.c.l.b16 %v105
    %v438 = vunpack.c.l.b16 %v106
    %v439 = vunpack.c.l.b16 %v107
    %v440 = vunpack.c.l.b16 %v108
    %v441 = vunpack.c.l.b16 %v109
    %v442 = vunpack.c.l.b16 %v110
    %v443 = vunpack.c.l.b16 %v111
    %v444 = vunpack.c.l.b16 %v112
    %v445 = vunpack.c.l.b16 %v113
    %v446 = vunpack.c.l.b16 %v114
    %v447 = vunpack.c.l.b16 %v115
    %v448 = vunpack.c.l.b16 %v116
    %v449 = vunpack.c.l.b16 %v117
    %v450 = vunpack.c.l.b16 %v118
    %v451 = vunpack.c.l.b16 %v119
    %v452 = vunpack.c.l.b16 %v120
    %v453 = vunpack.c.l.b16 %v121
    %v454 = vunpack.c.l.b16 %v122
    %v455 = vunpack.c.l.b16 %v123
    %v456 = vunpack.c.l.b16 %v124
    %v457 = vunpack.c.l.b16 %v125
    %v458 = vunpack.c.l.b16 %v126
    %v459 = vunpack.c.l.b16 %v127
    %v460 = vunpack.c.l.b16 %v128
    %v461 = vunpack.c.l.b16 %v129
    %v462 = vunpack.c.l.b16 %v130
    %v463 = vunpack.c.l.b16 %v131
    %v464 = vunpack.c.l.b16 %v132
    %v465 = vunpack.c.l.b16 %v133
    %v466 = vunpack.c.l.b16 %v134
    %v467 = vunpack.c.l.b16 %v135
    %v468 = vunpack.c.l.b16 %v136
    %v469 = vunpack.c.l.b16 %v137
    %v470 = vunpack.c.l.b16 %v138
    %v471 = vunpack.c.l.b16 %v139
    %v472 = vunpack.c.l.b16 %v140
    %v473 = vunpack.c.l.b16 %v141
    %v474 = vunpack.c.l.b16 %v142
    %v475 = vunpack.c.l.b16 %v143
    %v476 = vunpack.c.l.b16 %v144
    %v477 = vunpack.c.l.b16 %v145
    %v478 = vunpack.c.l.b16 %v146
    %v479 = vunpack.c.l.b16 %v147
    %v480 = vunpack.c.l.b16 %v148
    %v481 = vunpack.c.l.b16 %v149
    %v482 = vunpack.c.l.b16 %v150
    %v483 = vunpack.c.l.b16 %v151
    %v484 = vunpack.c.l.b16 %v152
    %v485 = vunpack.c.l.b16 %v153
    %v486 = vunpack.c.l.b16 %v154
    %v487 = vunpack.c.l.b16 %v155
    %v488 = vunpack.c.l.b16 %v156
    %v489 = vunpack.c.l.b16 %v157
    %v490 = vunpack.c.l.b16 %v158
    %v491 = vunpack.c.l.b16 %v159
    %v492 = vunpack.c.l.b16 %v160
    %v493 = vunpack.c.l.b16 %v161
    %v494 = vunpack.c.l.b16 %v162
    %v495 = vunpack.c.l.b16 %v163
    %v496 = vunpack.c.l.b16 %v164
    %v497 = vunpack.c.l.b16 %v165
    %v498 = vunpack.c.l.b16 %v166
    %v499 = vunpack.c.l.b16 %v167
    %v500 = vpack.c.b16 %v373, %v372
    %v501 = vpack.c.b16 %v375, %v374
    %v502 = vpack.c.b16 %v377, %v376
    %v503 = vpack.c.b16 %v379, %v378
    %v504 = vpack.c.b16 %v381, %v380
    %v505 = vpack.c.b16 %v383, %v382
    %v506 = vpack.c.b16 %v385, %v384
    %v507 = vpack.c.b16 %v387, %v386
    %v508 = vpack.c.b16 %v389, %v388
    %v509 = vpack.c.b16 %v391, %v390
    %v510 = vpack.c.b16 %v393, %v392
    %v511 = vpack.c.b16 %v395, %v394
    %v512 = vpack.c.b16 %v397, %v396
    %v513 = vpack.c.b16 %v399, %v398
    %v514 = vpack.c.b16 %v401, %v400
    %v515 = vpack.c.b16 %v403, %v402
    %v516 = vpack.c.b16 %v405, %v404
    %v517 = vpack.c.b16 %v407, %v406
    %v518 = vpack.c.b16 %v409, %v408
    %v519 = vpack.c.b16 %v411, %v410
    %v520 = vpack.c.b16 %v413, %v412
    %v521 = vpack.c.b16 %v415, %v414
    %v522 = vpack.c.b16 %v417, %v416
    %v523 = vpack.c.b16 %v419, %v418
    %v524 = vpack.c.b16 %v421, %v420
    %v525 = vpack.c.b16 %v423, %v422
    %v526 = vpack.c.b16 %v425, %v424
    %v527 = vpack.c.b16 %v427, %v426
    %v528 = vpack.c.b16 %v429, %v428
    %v529 = vpack.c.b16 %v431, %v430
    %v530 = vpack.c.b16 %v433, %v432
    %v531 = vpack.c.b16 %v435, %v434
    %v532 = vpack.c.b16 %v437, %v436
    %v533 = vpack.c.b16 %v439, %v438
    %v534 = vpack.c.b16 %v441, %v440
    %v535 = vpack.c.b16 %v443, %v442
    %v536 = vpack.c.b16 %v445, %v444
    %v537 = vpack.c.b16 %v447, %v446
    %v538 = vpack.c.b16 %v449, %v448
    %v539 = vpack.c.b16 %v451, %v450
    %v540 = vpack.c.b16 %v453, %v452
    %v541 = vpack.c.b16 %v455, %v454
    %v542 = vpack.c.b16 %v457, %v456
    %v543 = vpack.c.b16 %v459, %v458
    %v544 = vpack.c.b16 %v461, %v460
    %v545 = vpack.c.b16 %v463, %v462
    %v546 = vpack.c.b16 %v465, %v464
    %v547 = vpack.c.b16 %v467, %v466
    %v548 = vpack.c.b16 %v469, %v468
    %v549 = vpack.c.b16 %v471, %v470
    %v550 = vpack.c.b16 %v473, %v472
    %v551 = vpack.c.b16 %v475, %v474
    %v552 = vpack.c.b16 %v477, %v476
    %v553 = vpack.c.b16 %v479, %v478
    %v554 = vpack.c.b16 %v481, %v480
    %v555 = vpack.c.b16 %v483, %v482
    %v556 = vpack.c.b16 %v485, %v484
    %v557 = vpack.c.b16 %v487, %v486
    %v558 = vpack.c.b16 %v489, %v488
    %v559 = vpack.c.b16 %v491, %v490
    %v560 = vpack.c.b16 %v493, %v492
    %v561 = vpack.c.b16 %v495, %v494
    %v562 = vpack.c.b16 %v497, %v496
    %v563 = vpack.c.b16 %v499, %v498
    %628 = vmatprep.subr.bf16.mxu0 0
    %629 = vmatpush1.bf16.msra.mxu0 %v507
    %630 = vmatprep.subr.bf16.mxu0 0
    %631 = vmatpush1.bf16.msra.mxu0 %v506
    %632 = vmatprep.subr.bf16.mxu0 0
    %633 = vmatpush1.bf16.msra.mxu0 %v505
    %634 = vmatprep.subr.bf16.mxu0 0
    %635 = vmatpush1.bf16.msra.mxu0 %v504
    %636 = vmatprep.subr.bf16.mxu0 0
    %637 = vmatpush1.bf16.msra.mxu0 %v503
    %638 = vmatprep.subr.bf16.mxu0 0
    %639 = vmatpush1.bf16.msra.mxu0 %v502
    %640 = vmatprep.subr.bf16.mxu0 0
    %641 = vmatpush1.bf16.msra.mxu0 %v501
    %642 = vmatprep.subr.bf16.mxu0 0
    %643 = vmatpush1.bf16.msra.mxu0 %v500
    %644 = vmatprep.subr.bf16.mxu0 0
    %645 = vmatpush2.bf16.msra.mxu0 %v515
    %646 = vmatprep.subr.bf16.mxu0 0
    %647 = vmatpush2.bf16.msra.mxu0 %v514
    %648 = vmatprep.subr.bf16.mxu0 0
    %649 = vmatpush2.bf16.msra.mxu0 %v513
    %650 = vmatprep.subr.bf16.mxu0 0
    %651 = vmatpush2.bf16.msra.mxu0 %v512
    %652 = vmatprep.subr.bf16.mxu0 0
    %653 = vmatpush2.bf16.msra.mxu0 %v511
    %654 = vmatprep.subr.bf16.mxu0 0
    %655 = vmatpush2.bf16.msra.mxu0 %v510
    %656 = vmatprep.subr.bf16.mxu0 0
    %657 = vmatpush2.bf16.msra.mxu0 %v509
    %658 = vmatprep.subr.bf16.mxu0 0
    %659 = vmatpush2.bf16.msra.mxu0 %v508
    %660 = vmatprep.mubr.bf16.mxu0 %v231
    %661 = vmatmul.mubr.bf16.gmra.mxu0 %v230
    %v662 = vpop.f32.mrf.mxu0
    %v663 = vadd.f32 %v242, %v662
    %v664 = vpop.f32.mrf.mxu0
    %v665 = vpop.f32.mrf.mxu0
    %v666 = vpop.f32.mrf.mxu0
    %667 = vdwg.mxu0
    %668 = vmatprep.subr.bf16.mxu0 0
    %669 = vmatpush1.bf16.msra.mxu0 %v523
    %670 = vmatprep.subr.bf16.mxu0 0
    %671 = vmatpush1.bf16.msra.mxu0 %v522
    %672 = vmatprep.subr.bf16.mxu0 0
    %673 = vmatpush1.bf16.msra.mxu0 %v521
    %674 = vmatprep.subr.bf16.mxu0 0
    %675 = vmatpush1.bf16.msra.mxu0 %v520
    %676 = vmatprep.subr.bf16.mxu0 0
    %677 = vmatpush1.bf16.msra.mxu0 %v519
    %678 = vmatprep.subr.bf16.mxu0 0
    %679 = vmatpush1.bf16.msra.mxu0 %v518
    %680 = vmatprep.subr.bf16.mxu0 0
    %681 = vmatpush1.bf16.msra.mxu0 %v517
    %682 = vmatprep.subr.bf16.mxu0 0
    %683 = vmatpush1.bf16.msra.mxu0 %v516
    %684 = vmatprep.subr.bf16.mxu0 0
    %685 = vmatpush2.bf16.msra.mxu0 %v531
    %686 = vmatprep.subr.bf16.mxu0 0
    %687 = vmatpush2.bf16.msra.mxu0 %v530
    %688 = vmatprep.subr.bf16.mxu0 0
    %689 = vmatpush2.bf16.msra.mxu0 %v529
    %690 = vmatprep.subr.bf16.mxu0 0
    %691 = vmatpush2.bf16.msra.mxu0 %v528
    %692 = vmatprep.subr.bf16.mxu0 0
    %693 = vmatpush2.bf16.msra.mxu0 %v527
    %694 = vmatprep.subr.bf16.mxu0 0
    %695 = vmatpush2.bf16.msra.mxu0 %v526
    %696 = vmatprep.subr.bf16.mxu0 0
    %697 = vmatpush2.bf16.msra.mxu0 %v525
    %698 = vmatprep.subr.bf16.mxu0 0
    %699 = vmatpush2.bf16.msra.mxu0 %v524
    %700 = vmatprep.mubr.bf16.mxu0 %v233
    %701 = vmatmul.mubr.bf16.gmra.mxu0 %v232
    %v702 = vpop.f32.mrf.mxu0
    %v703 = vadd.f32 %v663, %v702
    %v704 = vpop.f32.mrf.mxu0
    %v705 = vpop.f32.mrf.mxu0
    %v706 = vpop.f32.mrf.mxu0
    %707 = vdwg.mxu0
    %708 = vmatprep.subr.bf16.mxu0 0
    %709 = vmatpush1.bf16.msra.mxu0 %v539
    %710 = vmatprep.subr.bf16.mxu0 0
    %711 = vmatpush1.bf16.msra.mxu0 %v538
    %712 = vmatprep.subr.bf16.mxu0 0
    %713 = vmatpush1.bf16.msra.mxu0 %v537
    %714 = vmatprep.subr.bf16.mxu0 0
    %715 = vmatpush1.bf16.msra.mxu0 %v536
    %716 = vmatprep.subr.bf16.mxu0 0
    %717 = vmatpush1.bf16.msra.mxu0 %v535
    %718 = vmatprep.subr.bf16.mxu0 0
    %719 = vmatpush1.bf16.msra.mxu0 %v534
    %720 = vmatprep.subr.bf16.mxu0 0
    %721 = vmatpush1.bf16.msra.mxu0 %v533
    %722 = vmatprep.subr.bf16.mxu0 0
    %723 = vmatpush1.bf16.msra.mxu0 %v532
    %724 = vmatprep.subr.bf16.mxu0 0
    %725 = vmatpush2.bf16.msra.mxu0 %v547
    %726 = vmatprep.subr.bf16.mxu0 0
    %727 = vmatpush2.bf16.msra.mxu0 %v546
    %728 = vmatprep.subr.bf16.mxu0 0
    %729 = vmatpush2.bf16.msra.mxu0 %v545
    %730 = vmatprep.subr.bf16.mxu0 0
    %731 = vmatpush2.bf16.msra.mxu0 %v544
    %732 = vmatprep.subr.bf16.mxu0 0
    %733 = vmatpush2.bf16.msra.mxu0 %v543
    %734 = vmatprep.subr.bf16.mxu0 0
    %735 = vmatpush2.bf16.msra.mxu0 %v542
    %736 = vmatprep.subr.bf16.mxu0 0
    %737 = vmatpush2.bf16.msra.mxu0 %v541
    %738 = vmatprep.subr.bf16.mxu0 0
    %739 = vmatpush2.bf16.msra.mxu0 %v540
    %740 = vmatprep.mubr.bf16.mxu0 %v235
    %741 = vmatmul.mubr.bf16.gmra.mxu0 %v234
    %v742 = vpop.f32.mrf.mxu0
    %v743 = vadd.f32 %v703, %v742
    %v744 = vpop.f32.mrf.mxu0
    %v745 = vpop.f32.mrf.mxu0
    %v746 = vpop.f32.mrf.mxu0
    %747 = vdwg.mxu0
    %748 = vmatprep.subr.bf16.mxu0 0
    %749 = vmatpush1.bf16.msra.mxu0 %v555
    %750 = vmatprep.subr.bf16.mxu0 0
    %751 = vmatpush1.bf16.msra.mxu0 %v554
    %752 = vmatprep.subr.bf16.mxu0 0
    %753 = vmatpush1.bf16.msra.mxu0 %v553
    %754 = vmatprep.subr.bf16.mxu0 0
    %755 = vmatpush1.bf16.msra.mxu0 %v552
    %756 = vmatprep.subr.bf16.mxu0 0
    %757 = vmatpush1.bf16.msra.mxu0 %v551
    %758 = vmatprep.subr.bf16.mxu0 0
    %759 = vmatpush1.bf16.msra.mxu0 %v550
    %760 = vmatprep.subr.bf16.mxu0 0
    %761 = vmatpush1.bf16.msra.mxu0 %v549
    %762 = vmatprep.subr.bf16.mxu0 0
    %763 = vmatpush1.bf16.msra.mxu0 %v548
    %764 = vmatprep.subr.bf16.mxu0 0
    %765 = vmatpush2.bf16.msra.mxu0 %v563
    %766 = vmatprep.subr.bf16.mxu0 0
    %767 = vmatpush2.bf16.msra.mxu0 %v562
    %768 = vmatprep.subr.bf16.mxu0 0
    %769 = vmatpush2.bf16.msra.mxu0 %v561
    %770 = vmatprep.subr.bf16.mxu0 0
    %771 = vmatpush2.bf16.msra.mxu0 %v560
    %772 = vmatprep.subr.bf16.mxu0 0
    %773 = vmatpush2.bf16.msra.mxu0 %v559
    %774 = vmatprep.subr.bf16.mxu0 0
    %775 = vmatpush2.bf16.msra.mxu0 %v558
    %776 = vmatprep.subr.bf16.mxu0 0
    %777 = vmatpush2.bf16.msra.mxu0 %v557
    %778 = vmatprep.subr.bf16.mxu0 0
    %779 = vmatpush2.bf16.msra.mxu0 %v556
    %780 = vmatprep.mubr.bf16.mxu0 %v237
    %781 = vmatmul.mubr.bf16.gmra.mxu0 %v236
    %v782 = vpop.f32.mrf.mxu0
    %v783 = vadd.f32 %v743, %v782
    %v784 = vpop.f32.mrf.mxu0
    %v785 = vpop.f32.mrf.mxu0
    %v786 = vpop.f32.mrf.mxu0
    %787 = vdwg.mxu0
    %v788 = vmax.f32 %v783, 0.0
    %v789 = vpack.c.bf16 %v788, %v788
    %v791 = vlaneseq
    %v792 = vshrl.u32 %v791, 7
    %v793 = vsub.s32 0, %v792
    %v794 = vrot.slane %v185, %v793
    %v812 = vunpack.c.l.b16 %v169
    %v813 = vunpack.c.l.b16 %v170
    %v814 = vunpack.c.l.b16 %v171
    %v815 = vunpack.c.l.b16 %v172
    %v816 = vunpack.c.l.b16 %v173
    %v817 = vunpack.c.l.b16 %v174
    %v818 = vunpack.c.l.b16 %v175
    %v819 = vunpack.c.l.b16 %v176
    %v820 = vunpack.c.l.b16 %v177
    %v821 = vunpack.c.l.b16 %v178
    %v822 = vunpack.c.l.b16 %v179
    %v823 = vunpack.c.l.b16 %v180
    %v824 = vunpack.c.l.b16 %v181
    %v825 = vunpack.c.l.b16 %v182
    %v826 = vunpack.c.l.b16 %v183
    %v827 = vunpack.c.l.b16 %v184
    %v828 = vpack.c.b16 %v813, %v812
    %v829 = vpack.c.b16 %v815, %v814
    %v830 = vpack.c.b16 %v817, %v816
    %v831 = vpack.c.b16 %v819, %v818
    %v832 = vpack.c.b16 %v821, %v820
    %v833 = vpack.c.b16 %v823, %v822
    %v834 = vpack.c.b16 %v825, %v824
    %v835 = vpack.c.b16 %v827, %v826
    %844 = vmatprep.subr.bf16.mxu0 0
    %845 = vmatpush1.bf16.msra.mxu0 %v835
    %846 = vmatprep.subr.bf16.mxu0 0
    %847 = vmatpush1.bf16.msra.mxu0 %v834
    %848 = vmatprep.subr.bf16.mxu0 0
    %849 = vmatpush1.bf16.msra.mxu0 %v833
    %850 = vmatprep.subr.bf16.mxu0 0
    %851 = vmatpush1.bf16.msra.mxu0 %v832
    %852 = vmatprep.subr.bf16.mxu0 0
    %853 = vmatpush1.bf16.msra.mxu0 %v831
    %854 = vmatprep.subr.bf16.mxu0 0
    %855 = vmatpush1.bf16.msra.mxu0 %v830
    %856 = vmatprep.subr.bf16.mxu0 0
    %857 = vmatpush1.bf16.msra.mxu0 %v829
    %858 = vmatprep.subr.bf16.mxu0 0
    %859 = vmatpush1.bf16.msra.mxu0 %v828
    %860 = vmatprep.subr.bf16.mxu0 0
    %861 = vmatpush2.bf16.msra.mxu0 0
    %862 = vmatprep.subr.bf16.mxu0 0
    %863 = vmatpush2.bf16.msra.mxu0 0
    %864 = vmatprep.subr.bf16.mxu0 0
    %865 = vmatpush2.bf16.msra.mxu0 0
    %866 = vmatprep.subr.bf16.mxu0 0
    %867 = vmatpush2.bf16.msra.mxu0 0
    %868 = vmatprep.subr.bf16.mxu0 0
    %869 = vmatpush2.bf16.msra.mxu0 0
    %870 = vmatprep.subr.bf16.mxu0 0
    %871 = vmatpush2.bf16.msra.mxu0 0
    %872 = vmatprep.subr.bf16.mxu0 0
    %873 = vmatpush2.bf16.msra.mxu0 0
    %874 = vmatprep.subr.bf16.mxu0 0
    %875 = vmatpush2.bf16.msra.mxu0 0
    %876 = vmatprep.mubr.bf16.mxu0 0
    %877 = vmatmul.mubr.bf16.gmra.mxu0 %v789
    %v878 = vpop.f32.mrf.mxu0
    %v879 = vadd.f32 %v794, %v878
    %v880 = vpop.f32.mrf.mxu0
    %v881 = vpop.f32.mrf.mxu0
    %v882 = vpop.f32.mrf.mxu0
    %883 = vdwg.mxu0
    %884 = vst [vmem:[%s6] sm:$0x3] %v879
    %v885 = vld [vmem:[%s1] sm:$0xff]
    %v886 = vld [vmem:[%s1 + $0x8] sm:$0xff]
    %s887 = scalar_lea.vmem [#allocation2], 512
    %v888 = vld [vmem:[%s887] sm:$0xf]
    %v889 = vld [vmem:[%s887 + $0x4] sm:$0xf]
    %v890 = vld [vmem:[%s887 + $0x8] sm:$0xf]
    %v891 = vld [vmem:[%s887 + $0xc] sm:$0xf]
    %v892 = vld [vmem:[%s887 + $0x10] sm:$0xf]
    %v893 = vld [vmem:[%s887 + $0x14] sm:$0xf]
    %v894 = vld [vmem:[%s887 + $0x18] sm:$0xf]
    %v895 = vld [vmem:[%s887 + $0x1c] sm:$0xf]
    %v896 = vld [vmem:[%s887 + $0x20] sm:$0xf]
    %v897 = vld [vmem:[%s887 + $0x24] sm:$0xf]
    %v898 = vld [vmem:[%s887 + $0x28] sm:$0xf]
    %v899 = vld [vmem:[%s887 + $0x2c] sm:$0xf]
    %v900 = vld [vmem:[%s887 + $0x30] sm:$0xf]
    %v901 = vld [vmem:[%s887 + $0x34] sm:$0xf]
    %v902 = vld [vmem:[%s887 + $0x38] sm:$0xf]
    %v903 = vld [vmem:[%s887 + $0x3c] sm:$0xf]
    %v904 = vld [vmem:[%s887 + $0x40] sm:$0xf]
    %v905 = vld [vmem:[%s887 + $0x44] sm:$0xf]
    %v906 = vld [vmem:[%s887 + $0x48] sm:$0xf]
    %v907 = vld [vmem:[%s887 + $0x4c] sm:$0xf]
    %v908 = vld [vmem:[%s887 + $0x50] sm:$0xf]
    %v909 = vld [vmem:[%s887 + $0x54] sm:$0xf]
    %v910 = vld [vmem:[%s887 + $0x58] sm:$0xf]
    %v911 = vld [vmem:[%s887 + $0x5c] sm:$0xf]
    %v912 = vld [vmem:[%s887 + $0x60] sm:$0xf]
    %v913 = vld [vmem:[%s887 + $0x64] sm:$0xf]
    %v914 = vld [vmem:[%s887 + $0x68] sm:$0xf]
    %v915 = vld [vmem:[%s887 + $0x6c] sm:$0xf]
    %v916 = vld [vmem:[%s887 + $0x70] sm:$0xf]
    %v917 = vld [vmem:[%s887 + $0x74] sm:$0xf]
    %v918 = vld [vmem:[%s887 + $0x78] sm:$0xf]
    %v919 = vld [vmem:[%s887 + $0x7c] sm:$0xf]
    %v920 = vld [vmem:[%s887 + $0x80] sm:$0xf]
    %v921 = vld [vmem:[%s887 + $0x84] sm:$0xf]
    %v922 = vld [vmem:[%s887 + $0x88] sm:$0xf]
    %v923 = vld [vmem:[%s887 + $0x8c] sm:$0xf]
    %v924 = vld [vmem:[%s887 + $0x90] sm:$0xf]
    %v925 = vld [vmem:[%s887 + $0x94] sm:$0xf]
    %v926 = vld [vmem:[%s887 + $0x98] sm:$0xf]
    %v927 = vld [vmem:[%s887 + $0x9c] sm:$0xf]
    %v928 = vld [vmem:[%s887 + $0xa0] sm:$0xf]
    %v929 = vld [vmem:[%s887 + $0xa4] sm:$0xf]
    %v930 = vld [vmem:[%s887 + $0xa8] sm:$0xf]
    %v931 = vld [vmem:[%s887 + $0xac] sm:$0xf]
    %v932 = vld [vmem:[%s887 + $0xb0] sm:$0xf]
    %v933 = vld [vmem:[%s887 + $0xb4] sm:$0xf]
    %v934 = vld [vmem:[%s887 + $0xb8] sm:$0xf]
    %v935 = vld [vmem:[%s887 + $0xbc] sm:$0xf]
    %v936 = vld [vmem:[%s887 + $0xc0] sm:$0xf]
    %v937 = vld [vmem:[%s887 + $0xc4] sm:$0xf]
    %v938 = vld [vmem:[%s887 + $0xc8] sm:$0xf]
    %v939 = vld [vmem:[%s887 + $0xcc] sm:$0xf]
    %v940 = vld [vmem:[%s887 + $0xd0] sm:$0xf]
    %v941 = vld [vmem:[%s887 + $0xd4] sm:$0xf]
    %v942 = vld [vmem:[%s887 + $0xd8] sm:$0xf]
    %v943 = vld [vmem:[%s887 + $0xdc] sm:$0xf]
    %v944 = vld [vmem:[%s887 + $0xe0] sm:$0xf]
    %v945 = vld [vmem:[%s887 + $0xe4] sm:$0xf]
    %v946 = vld [vmem:[%s887 + $0xe8] sm:$0xf]
    %v947 = vld [vmem:[%s887 + $0xec] sm:$0xf]
    %v948 = vld [vmem:[%s887 + $0xf0] sm:$0xf]
    %v949 = vld [vmem:[%s887 + $0xf4] sm:$0xf]
    %v950 = vld [vmem:[%s887 + $0xf8] sm:$0xf]
    %v951 = vld [vmem:[%s887 + $0xfc] sm:$0xf]
    %v952 = vld [vmem:[%s887 + $0x100] sm:$0xf]
    %v953 = vld [vmem:[%s887 + $0x104] sm:$0xf]
    %v954 = vld [vmem:[%s887 + $0x108] sm:$0xf]
    %v955 = vld [vmem:[%s887 + $0x10c] sm:$0xf]
    %v956 = vld [vmem:[%s887 + $0x110] sm:$0xf]
    %v957 = vld [vmem:[%s887 + $0x114] sm:$0xf]
    %v958 = vld [vmem:[%s887 + $0x118] sm:$0xf]
    %v959 = vld [vmem:[%s887 + $0x11c] sm:$0xf]
    %v960 = vld [vmem:[%s887 + $0x120] sm:$0xf]
    %v961 = vld [vmem:[%s887 + $0x124] sm:$0xf]
    %v962 = vld [vmem:[%s887 + $0x128] sm:$0xf]
    %v963 = vld [vmem:[%s887 + $0x12c] sm:$0xf]
    %v964 = vld [vmem:[%s887 + $0x130] sm:$0xf]
    %v965 = vld [vmem:[%s887 + $0x134] sm:$0xf]
    %v966 = vld [vmem:[%s887 + $0x138] sm:$0xf]
    %v967 = vld [vmem:[%s887 + $0x13c] sm:$0xf]
    %v968 = vld [vmem:[%s887 + $0x140] sm:$0xf]
    %v969 = vld [vmem:[%s887 + $0x144] sm:$0xf]
    %v970 = vld [vmem:[%s887 + $0x148] sm:$0xf]
    %v971 = vld [vmem:[%s887 + $0x14c] sm:$0xf]
    %v972 = vld [vmem:[%s887 + $0x150] sm:$0xf]
    %v973 = vld [vmem:[%s887 + $0x154] sm:$0xf]
    %v974 = vld [vmem:[%s887 + $0x158] sm:$0xf]
    %v975 = vld [vmem:[%s887 + $0x15c] sm:$0xf]
    %v976 = vld [vmem:[%s887 + $0x160] sm:$0xf]
    %v977 = vld [vmem:[%s887 + $0x164] sm:$0xf]
    %v978 = vld [vmem:[%s887 + $0x168] sm:$0xf]
    %v979 = vld [vmem:[%s887 + $0x16c] sm:$0xf]
    %v980 = vld [vmem:[%s887 + $0x170] sm:$0xf]
    %v981 = vld [vmem:[%s887 + $0x174] sm:$0xf]
    %v982 = vld [vmem:[%s887 + $0x178] sm:$0xf]
    %v983 = vld [vmem:[%s887 + $0x17c] sm:$0xf]
    %v984 = vld [vmem:[%s887 + $0x180] sm:$0xf]
    %v985 = vld [vmem:[%s887 + $0x184] sm:$0xf]
    %v986 = vld [vmem:[%s887 + $0x188] sm:$0xf]
    %v987 = vld [vmem:[%s887 + $0x18c] sm:$0xf]
    %v988 = vld [vmem:[%s887 + $0x190] sm:$0xf]
    %v989 = vld [vmem:[%s887 + $0x194] sm:$0xf]
    %v990 = vld [vmem:[%s887 + $0x198] sm:$0xf]
    %v991 = vld [vmem:[%s887 + $0x19c] sm:$0xf]
    %v992 = vld [vmem:[%s887 + $0x1a0] sm:$0xf]
    %v993 = vld [vmem:[%s887 + $0x1a4] sm:$0xf]
    %v994 = vld [vmem:[%s887 + $0x1a8] sm:$0xf]
    %v995 = vld [vmem:[%s887 + $0x1ac] sm:$0xf]
    %v996 = vld [vmem:[%s887 + $0x1b0] sm:$0xf]
    %v997 = vld [vmem:[%s887 + $0x1b4] sm:$0xf]
    %v998 = vld [vmem:[%s887 + $0x1b8] sm:$0xf]
    %v999 = vld [vmem:[%s887 + $0x1bc] sm:$0xf]
    %v1000 = vld [vmem:[%s887 + $0x1c0] sm:$0xf]
    %v1001 = vld [vmem:[%s887 + $0x1c4] sm:$0xf]
    %v1002 = vld [vmem:[%s887 + $0x1c8] sm:$0xf]
    %v1003 = vld [vmem:[%s887 + $0x1cc] sm:$0xf]
    %v1004 = vld [vmem:[%s887 + $0x1d0] sm:$0xf]
    %v1005 = vld [vmem:[%s887 + $0x1d4] sm:$0xf]
    %v1006 = vld [vmem:[%s887 + $0x1d8] sm:$0xf]
    %v1007 = vld [vmem:[%s887 + $0x1dc] sm:$0xf]
    %v1008 = vld [vmem:[%s887 + $0x1e0] sm:$0xf]
    %v1009 = vld [vmem:[%s887 + $0x1e4] sm:$0xf]
    %v1010 = vld [vmem:[%s887 + $0x1e8] sm:$0xf]
    %v1011 = vld [vmem:[%s887 + $0x1ec] sm:$0xf]
    %v1012 = vld [vmem:[%s887 + $0x1f0] sm:$0xf]
    %v1013 = vld [vmem:[%s887 + $0x1f4] sm:$0xf]
    %v1014 = vld [vmem:[%s887 + $0x1f8] sm:$0xf]
    %v1015 = vld [vmem:[%s887 + $0x1fc] sm:$0xf]
    %s1016 = scalar_lea.vmem %s3, 1
    %v1017 = vld [vmem:[%s1016] sm:$0x1]
    %s1018 = scalar_lea.vmem %s4, 64
    %v1019 = vld [vmem:[%s1018] sm:$0xf]
    %v1020 = vld [vmem:[%s1018 + $0x4] sm:$0xf]
    %v1021 = vld [vmem:[%s1018 + $0x8] sm:$0xf]
    %v1022 = vld [vmem:[%s1018 + $0xc] sm:$0xf]
    %v1023 = vld [vmem:[%s1018 + $0x10] sm:$0xf]
    %v1024 = vld [vmem:[%s1018 + $0x14] sm:$0xf]
    %v1025 = vld [vmem:[%s1018 + $0x18] sm:$0xf]
    %v1026 = vld [vmem:[%s1018 + $0x1c] sm:$0xf]
    %v1027 = vld [vmem:[%s1018 + $0x20] sm:$0xf]
    %v1028 = vld [vmem:[%s1018 + $0x24] sm:$0xf]
    %v1029 = vld [vmem:[%s1018 + $0x28] sm:$0xf]
    %v1030 = vld [vmem:[%s1018 + $0x2c] sm:$0xf]
    %v1031 = vld [vmem:[%s1018 + $0x30] sm:$0xf]
    %v1032 = vld [vmem:[%s1018 + $0x34] sm:$0xf]
    %v1033 = vld [vmem:[%s1018 + $0x38] sm:$0xf]
    %v1034 = vld [vmem:[%s1018 + $0x3c] sm:$0xf]
    %s1035 = scalar_lea.vmem %s5, 1
    %v1036 = vld [vmem:[%s1035] sm:$0x1]
    %v1039 = vcombine.high %v885, %v885
    %v1041 = vunpack.c.l.s4 1983009808
    %v1042 = vunpack.c.0.s8 %v1041
    %v1043 = vlaneseq
    %v1044 = vshrl.u32 %v1043, 7
    %v1045 = vsub.s32 %v1042, %v1044
    %v1046 = vrot.slane %v885, %v1045
    %v1048 = vunpack.c.l.s4 1983009808
    %v1049 = vunpack.c.0.s8 %v1048
    %v1050 = vlaneseq
    %v1051 = vshrl.u32 %v1050, 7
    %v1052 = vsub.s32 %v1049, %v1051
    %v1053 = vrot.slane %v1039, %v1052
    %v1054 = vcombine.high %v1046, %v1046
    %v1055 = vcombine.high %v1053, %v1053
    %v1056 = vcombine.high %v886, %v886
    %v1058 = vunpack.c.l.s4 1983009808
    %v1059 = vunpack.c.0.s8 %v1058
    %v1060 = vlaneseq
    %v1061 = vshrl.u32 %v1060, 7
    %v1062 = vsub.s32 %v1059, %v1061
    %v1063 = vrot.slane %v886, %v1062
    %v1065 = vunpack.c.l.s4 1983009808
    %v1066 = vunpack.c.0.s8 %v1065
    %v1067 = vlaneseq
    %v1068 = vshrl.u32 %v1067, 7
    %v1069 = vsub.s32 %v1066, %v1068
    %v1070 = vrot.slane %v1056, %v1069
    %v1071 = vcombine.high %v1063, %v1063
    %v1072 = vcombine.high %v1070, %v1070
    %v1081 = vpack.c.bf16 %v1046, %v1046
    %v1082 = vpack.c.bf16 %v1054, %v1054
    %v1083 = vpack.c.bf16 %v1053, %v1053
    %v1084 = vpack.c.bf16 %v1055, %v1055
    %v1085 = vpack.c.bf16 %v1063, %v1063
    %v1086 = vpack.c.bf16 %v1071, %v1071
    %v1087 = vpack.c.bf16 %v1070, %v1070
    %v1088 = vpack.c.bf16 %v1072, %v1072
    %v1090 = vlaneseq
    %v1091 = vshrl.u32 %v1090, 7
    %v1092 = vsub.s32 0, %v1091
    %v1093 = vrot.slane %v1017, %v1092
    %v1223 = vunpack.c.l.b16 %v888
    %v1224 = vunpack.c.l.b16 %v889
    %v1225 = vunpack.c.l.b16 %v890
    %v1226 = vunpack.c.l.b16 %v891
    %v1227 = vunpack.c.l.b16 %v892
    %v1228 = vunpack.c.l.b16 %v893
    %v1229 = vunpack.c.l.b16 %v894
    %v1230 = vunpack.c.l.b16 %v895
    %v1231 = vunpack.c.l.b16 %v896
    %v1232 = vunpack.c.l.b16 %v897
    %v1233 = vunpack.c.l.b16 %v898
    %v1234 = vunpack.c.l.b16 %v899
    %v1235 = vunpack.c.l.b16 %v900
    %v1236 = vunpack.c.l.b16 %v901
    %v1237 = vunpack.c.l.b16 %v902
    %v1238 = vunpack.c.l.b16 %v903
    %v1239 = vunpack.c.l.b16 %v904
    %v1240 = vunpack.c.l.b16 %v905
    %v1241 = vunpack.c.l.b16 %v906
    %v1242 = vunpack.c.l.b16 %v907
    %v1243 = vunpack.c.l.b16 %v908
    %v1244 = vunpack.c.l.b16 %v909
    %v1245 = vunpack.c.l.b16 %v910
    %v1246 = vunpack.c.l.b16 %v911
    %v1247 = vunpack.c.l.b16 %v912
    %v1248 = vunpack.c.l.b16 %v913
    %v1249 = vunpack.c.l.b16 %v914
    %v1250 = vunpack.c.l.b16 %v915
    %v1251 = vunpack.c.l.b16 %v916
    %v1252 = vunpack.c.l.b16 %v917
    %v1253 = vunpack.c.l.b16 %v918
    %v1254 = vunpack.c.l.b16 %v919
    %v1255 = vunpack.c.l.b16 %v920
    %v1256 = vunpack.c.l.b16 %v921
    %v1257 = vunpack.c.l.b16 %v922
    %v1258 = vunpack.c.l.b16 %v923
    %v1259 = vunpack.c.l.b16 %v924
    %v1260 = vunpack.c.l.b16 %v925
    %v1261 = vunpack.c.l.b16 %v926
    %v1262 = vunpack.c.l.b16 %v927
    %v1263 = vunpack.c.l.b16 %v928
    %v1264 = vunpack.c.l.b16 %v929
    %v1265 = vunpack.c.l.b16 %v930
    %v1266 = vunpack.c.l.b16 %v931
    %v1267 = vunpack.c.l.b16 %v932
    %v1268 = vunpack.c.l.b16 %v933
    %v1269 = vunpack.c.l.b16 %v934
    %v1270 = vunpack.c.l.b16 %v935
    %v1271 = vunpack.c.l.b16 %v936
    %v1272 = vunpack.c.l.b16 %v937
    %v1273 = vunpack.c.l.b16 %v938
    %v1274 = vunpack.c.l.b16 %v939
    %v1275 = vunpack.c.l.b16 %v940
    %v1276 = vunpack.c.l.b16 %v941
    %v1277 = vunpack.c.l.b16 %v942
    %v1278 = vunpack.c.l.b16 %v943
    %v1279 = vunpack.c.l.b16 %v944
    %v1280 = vunpack.c.l.b16 %v945
    %v1281 = vunpack.c.l.b16 %v946
    %v1282 = vunpack.c.l.b16 %v947
    %v1283 = vunpack.c.l.b16 %v948
    %v1284 = vunpack.c.l.b16 %v949
    %v1285 = vunpack.c.l.b16 %v950
    %v1286 = vunpack.c.l.b16 %v951
    %v1287 = vunpack.c.l.b16 %v952
    %v1288 = vunpack.c.l.b16 %v953
    %v1289 = vunpack.c.l.b16 %v954
    %v1290 = vunpack.c.l.b16 %v955
    %v1291 = vunpack.c.l.b16 %v956
    %v1292 = vunpack.c.l.b16 %v957
    %v1293 = vunpack.c.l.b16 %v958
    %v1294 = vunpack.c.l.b16 %v959
    %v1295 = vunpack.c.l.b16 %v960
    %v1296 = vunpack.c.l.b16 %v961
    %v1297 = vunpack.c.l.b16 %v962
    %v1298 = vunpack.c.l.b16 %v963
    %v1299 = vunpack.c.l.b16 %v964
    %v1300 = vunpack.c.l.b16 %v965
    %v1301 = vunpack.c.l.b16 %v966
    %v1302 = vunpack.c.l.b16 %v967
    %v1303 = vunpack.c.l.b16 %v968
    %v1304 = vunpack.c.l.b16 %v969
    %v1305 = vunpack.c.l.b16 %v970
    %v1306 = vunpack.c.l.b16 %v971
    %v1307 = vunpack.c.l.b16 %v972
    %v1308 = vunpack.c.l.b16 %v973
    %v1309 = vunpack.c.l.b16 %v974
    %v1310 = vunpack.c.l.b16 %v975
    %v1311 = vunpack.c.l.b16 %v976
    %v1312 = vunpack.c.l.b16 %v977
    %v1313 = vunpack.c.l.b16 %v978
    %v1314 = vunpack.c.l.b16 %v979
    %v1315 = vunpack.c.l.b16 %v980
    %v1316 = vunpack.c.l.b16 %v981
    %v1317 = vunpack.c.l.b16 %v982
    %v1318 = vunpack.c.l.b16 %v983
    %v1319 = vunpack.c.l.b16 %v984
    %v1320 = vunpack.c.l.b16 %v985
    %v1321 = vunpack.c.l.b16 %v986
    %v1322 = vunpack.c.l.b16 %v987
    %v1323 = vunpack.c.l.b16 %v988
    %v1324 = vunpack.c.l.b16 %v989
    %v1325 = vunpack.c.l.b16 %v990
    %v1326 = vunpack.c.l.b16 %v991
    %v1327 = vunpack.c.l.b16 %v992
    %v1328 = vunpack.c.l.b16 %v993
    %v1329 = vunpack.c.l.b16 %v994
    %v1330 = vunpack.c.l.b16 %v995
    %v1331 = vunpack.c.l.b16 %v996
    %v1332 = vunpack.c.l.b16 %v997
    %v1333 = vunpack.c.l.b16 %v998
    %v1334 = vunpack.c.l.b16 %v999
    %v1335 = vunpack.c.l.b16 %v1000
    %v1336 = vunpack.c.l.b16 %v1001
    %v1337 = vunpack.c.l.b16 %v1002
    %v1338 = vunpack.c.l.b16 %v1003
    %v1339 = vunpack.c.l.b16 %v1004
    %v1340 = vunpack.c.l.b16 %v1005
    %v1341 = vunpack.c.l.b16 %v1006
    %v1342 = vunpack.c.l.b16 %v1007
    %v1343 = vunpack.c.l.b16 %v1008
    %v1344 = vunpack.c.l.b16 %v1009
    %v1345 = vunpack.c.l.b16 %v1010
    %v1346 = vunpack.c.l.b16 %v1011
    %v1347 = vunpack.c.l.b16 %v1012
    %v1348 = vunpack.c.l.b16 %v1013
    %v1349 = vunpack.c.l.b16 %v1014
    %v1350 = vunpack.c.l.b16 %v1015
    %v1351 = vpack.c.b16 %v1224, %v1223
    %v1352 = vpack.c.b16 %v1226, %v1225
    %v1353 = vpack.c.b16 %v1228, %v1227
    %v1354 = vpack.c.b16 %v1230, %v1229
    %v1355 = vpack.c.b16 %v1232, %v1231
    %v1356 = vpack.c.b16 %v1234, %v1233
    %v1357 = vpack.c.b16 %v1236, %v1235
    %v1358 = vpack.c.b16 %v1238, %v1237
    %v1359 = vpack.c.b16 %v1240, %v1239
    %v1360 = vpack.c.b16 %v1242, %v1241
    %v1361 = vpack.c.b16 %v1244, %v1243
    %v1362 = vpack.c.b16 %v1246, %v1245
    %v1363 = vpack.c.b16 %v1248, %v1247
    %v1364 = vpack.c.b16 %v1250, %v1249
    %v1365 = vpack.c.b16 %v1252, %v1251
    %v1366 = vpack.c.b16 %v1254, %v1253
    %v1367 = vpack.c.b16 %v1256, %v1255
    %v1368 = vpack.c.b16 %v1258, %v1257
    %v1369 = vpack.c.b16 %v1260, %v1259
    %v1370 = vpack.c.b16 %v1262, %v1261
    %v1371 = vpack.c.b16 %v1264, %v1263
    %v1372 = vpack.c.b16 %v1266, %v1265
    %v1373 = vpack.c.b16 %v1268, %v1267
    %v1374 = vpack.c.b16 %v1270, %v1269
    %v1375 = vpack.c.b16 %v1272, %v1271
    %v1376 = vpack.c.b16 %v1274, %v1273
    %v1377 = vpack.c.b16 %v1276, %v1275
    %v1378 = vpack.c.b16 %v1278, %v1277
    %v1379 = vpack.c.b16 %v1280, %v1279
    %v1380 = vpack.c.b16 %v1282, %v1281
    %v1381 = vpack.c.b16 %v1284, %v1283
    %v1382 = vpack.c.b16 %v1286, %v1285
    %v1383 = vpack.c.b16 %v1288, %v1287
    %v1384 = vpack.c.b16 %v1290, %v1289
    %v1385 = vpack.c.b16 %v1292, %v1291
    %v1386 = vpack.c.b16 %v1294, %v1293
    %v1387 = vpack.c.b16 %v1296, %v1295
    %v1388 = vpack.c.b16 %v1298, %v1297
    %v1389 = vpack.c.b16 %v1300, %v1299
    %v1390 = vpack.c.b16 %v1302, %v1301
    %v1391 = vpack.c.b16 %v1304, %v1303
    %v1392 = vpack.c.b16 %v1306, %v1305
    %v1393 = vpack.c.b16 %v1308, %v1307
    %v1394 = vpack.c.b16 %v1310, %v1309
    %v1395 = vpack.c.b16 %v1312, %v1311
    %v1396 = vpack.c.b16 %v1314, %v1313
    %v1397 = vpack.c.b16 %v1316, %v1315
    %v1398 = vpack.c.b16 %v1318, %v1317
    %v1399 = vpack.c.b16 %v1320, %v1319
    %v1400 = vpack.c.b16 %v1322, %v1321
    %v1401 = vpack.c.b16 %v1324, %v1323
    %v1402 = vpack.c.b16 %v1326, %v1325
    %v1403 = vpack.c.b16 %v1328, %v1327
    %v1404 = vpack.c.b16 %v1330, %v1329
    %v1405 = vpack.c.b16 %v1332, %v1331
    %v1406 = vpack.c.b16 %v1334, %v1333
    %v1407 = vpack.c.b16 %v1336, %v1335
    %v1408 = vpack.c.b16 %v1338, %v1337
    %v1409 = vpack.c.b16 %v1340, %v1339
    %v1410 = vpack.c.b16 %v1342, %v1341
    %v1411 = vpack.c.b16 %v1344, %v1343
    %v1412 = vpack.c.b16 %v1346, %v1345
    %v1413 = vpack.c.b16 %v1348, %v1347
    %v1414 = vpack.c.b16 %v1350, %v1349
    %1479 = vmatprep.subr.bf16.mxu0 0
    %1480 = vmatpush1.bf16.msra.mxu0 %v1358
    %1481 = vmatprep.subr.bf16.mxu0 0
    %1482 = vmatpush1.bf16.msra.mxu0 %v1357
    %1483 = vmatprep.subr.bf16.mxu0 0
    %1484 = vmatpush1.bf16.msra.mxu0 %v1356
    %1485 = vmatprep.subr.bf16.mxu0 0
    %1486 = vmatpush1.bf16.msra.mxu0 %v1355
    %1487 = vmatprep.subr.bf16.mxu0 0
    %1488 = vmatpush1.bf16.msra.mxu0 %v1354
    %1489 = vmatprep.subr.bf16.mxu0 0
    %1490 = vmatpush1.bf16.msra.mxu0 %v1353
    %1491 = vmatprep.subr.bf16.mxu0 0
    %1492 = vmatpush1.bf16.msra.mxu0 %v1352
    %1493 = vmatprep.subr.bf16.mxu0 0
    %1494 = vmatpush1.bf16.msra.mxu0 %v1351
    %1495 = vmatprep.subr.bf16.mxu0 0
    %1496 = vmatpush2.bf16.msra.mxu0 %v1366
    %1497 = vmatprep.subr.bf16.mxu0 0
    %1498 = vmatpush2.bf16.msra.mxu0 %v1365
    %1499 = vmatprep.subr.bf16.mxu0 0
    %1500 = vmatpush2.bf16.msra.mxu0 %v1364
    %1501 = vmatprep.subr.bf16.mxu0 0
    %1502 = vmatpush2.bf16.msra.mxu0 %v1363
    %1503 = vmatprep.subr.bf16.mxu0 0
    %1504 = vmatpush2.bf16.msra.mxu0 %v1362
    %1505 = vmatprep.subr.bf16.mxu0 0
    %1506 = vmatpush2.bf16.msra.mxu0 %v1361
    %1507 = vmatprep.subr.bf16.mxu0 0
    %1508 = vmatpush2.bf16.msra.mxu0 %v1360
    %1509 = vmatprep.subr.bf16.mxu0 0
    %1510 = vmatpush2.bf16.msra.mxu0 %v1359
    %1511 = vmatprep.mubr.bf16.mxu0 %v1082
    %1512 = vmatmul.mubr.bf16.gmra.mxu0 %v1081
    %v1513 = vpop.f32.mrf.mxu0
    %v1514 = vadd.f32 %v1093, %v1513
    %v1515 = vpop.f32.mrf.mxu0
    %v1516 = vpop.f32.mrf.mxu0
    %v1517 = vpop.f32.mrf.mxu0
    %1518 = vdwg.mxu0
    %1519 = vmatprep.subr.bf16.mxu0 0
    %1520 = vmatpush1.bf16.msra.mxu0 %v1374
    %1521 = vmatprep.subr.bf16.mxu0 0
    %1522 = vmatpush1.bf16.msra.mxu0 %v1373
    %1523 = vmatprep.subr.bf16.mxu0 0
    %1524 = vmatpush1.bf16.msra.mxu0 %v1372
    %1525 = vmatprep.subr.bf16.mxu0 0
    %1526 = vmatpush1.bf16.msra.mxu0 %v1371
    %1527 = vmatprep.subr.bf16.mxu0 0
    %1528 = vmatpush1.bf16.msra.mxu0 %v1370
    %1529 = vmatprep.subr.bf16.mxu0 0
    %1530 = vmatpush1.bf16.msra.mxu0 %v1369
    %1531 = vmatprep.subr.bf16.mxu0 0
    %1532 = vmatpush1.bf16.msra.mxu0 %v1368
    %1533 = vmatprep.subr.bf16.mxu0 0
    %1534 = vmatpush1.bf16.msra.mxu0 %v1367
    %1535 = vmatprep.subr.bf16.mxu0 0
    %1536 = vmatpush2.bf16.msra.mxu0 %v1382
    %1537 = vmatprep.subr.bf16.mxu0 0
    %1538 = vmatpush2.bf16.msra.mxu0 %v1381
    %1539 = vmatprep.subr.bf16.mxu0 0
    %1540 = vmatpush2.bf16.msra.mxu0 %v1380
    %1541 = vmatprep.subr.bf16.mxu0 0
    %1542 = vmatpush2.bf16.msra.mxu0 %v1379
    %1543 = vmatprep.subr.bf16.mxu0 0
    %1544 = vmatpush2.bf16.msra.mxu0 %v1378
    %1545 = vmatprep.subr.bf16.mxu0 0
    %1546 = vmatpush2.bf16.msra.mxu0 %v1377
    %1547 = vmatprep.subr.bf16.mxu0 0
    %1548 = vmatpush2.bf16.msra.mxu0 %v1376
    %1549 = vmatprep.subr.bf16.mxu0 0
    %1550 = vmatpush2.bf16.msra.mxu0 %v1375
    %1551 = vmatprep.mubr.bf16.mxu0 %v1084
    %1552 = vmatmul.mubr.bf16.gmra.mxu0 %v1083
    %v1553 = vpop.f32.mrf.mxu0
    %v1554 = vadd.f32 %v1514, %v1553
    %v1555 = vpop.f32.mrf.mxu0
    %v1556 = vpop.f32.mrf.mxu0
    %v1557 = vpop.f32.mrf.mxu0
    %1558 = vdwg.mxu0
    %1559 = vmatprep.subr.bf16.mxu0 0
    %1560 = vmatpush1.bf16.msra.mxu0 %v1390
    %1561 = vmatprep.subr.bf16.mxu0 0
    %1562 = vmatpush1.bf16.msra.mxu0 %v1389
    %1563 = vmatprep.subr.bf16.mxu0 0
    %1564 = vmatpush1.bf16.msra.mxu0 %v1388
    %1565 = vmatprep.subr.bf16.mxu0 0
    %1566 = vmatpush1.bf16.msra.mxu0 %v1387
    %1567 = vmatprep.subr.bf16.mxu0 0
    %1568 = vmatpush1.bf16.msra.mxu0 %v1386
    %1569 = vmatprep.subr.bf16.mxu0 0
    %1570 = vmatpush1.bf16.msra.mxu0 %v1385
    %1571 = vmatprep.subr.bf16.mxu0 0
    %1572 = vmatpush1.bf16.msra.mxu0 %v1384
    %1573 = vmatprep.subr.bf16.mxu0 0
    %1574 = vmatpush1.bf16.msra.mxu0 %v1383
    %1575 = vmatprep.subr.bf16.mxu0 0
    %1576 = vmatpush2.bf16.msra.mxu0 %v1398
    %1577 = vmatprep.subr.bf16.mxu0 0
    %1578 = vmatpush2.bf16.msra.mxu0 %v1397
    %1579 = vmatprep.subr.bf16.mxu0 0
    %1580 = vmatpush2.bf16.msra.mxu0 %v1396
    %1581 = vmatprep.subr.bf16.mxu0 0
    %1582 = vmatpush2.bf16.msra.mxu0 %v1395
    %1583 = vmatprep.subr.bf16.mxu0 0
    %1584 = vmatpush2.bf16.msra.mxu0 %v1394
    %1585 = vmatprep.subr.bf16.mxu0 0
    %1586 = vmatpush2.bf16.msra.mxu0 %v1393
    %1587 = vmatprep.subr.bf16.mxu0 0
    %1588 = vmatpush2.bf16.msra.mxu0 %v1392
    %1589 = vmatprep.subr.bf16.mxu0 0
    %1590 = vmatpush2.bf16.msra.mxu0 %v1391
    %1591 = vmatprep.mubr.bf16.mxu0 %v1086
    %1592 = vmatmul.mubr.bf16.gmra.mxu0 %v1085
    %v1593 = vpop.f32.mrf.mxu0
    %v1594 = vadd.f32 %v1554, %v1593
    %v1595 = vpop.f32.mrf.mxu0
    %v1596 = vpop.f32.mrf.mxu0
    %v1597 = vpop.f32.mrf.mxu0
    %1598 = vdwg.mxu0
    %1599 = vmatprep.subr.bf16.mxu0 0
    %1600 = vmatpush1.bf16.msra.mxu0 %v1406
    %1601 = vmatprep.subr.bf16.mxu0 0
    %1602 = vmatpush1.bf16.msra.mxu0 %v1405
    %1603 = vmatprep.subr.bf16.mxu0 0
    %1604 = vmatpush1.bf16.msra.mxu0 %v1404
    %1605 = vmatprep.subr.bf16.mxu0 0
    %1606 = vmatpush1.bf16.msra.mxu0 %v1403
    %1607 = vmatprep.subr.bf16.mxu0 0
    %1608 = vmatpush1.bf16.msra.mxu0 %v1402
    %1609 = vmatprep.subr.bf16.mxu0 0
    %1610 = vmatpush1.bf16.msra.mxu0 %v1401
    %1611 = vmatprep.subr.bf16.mxu0 0
    %1612 = vmatpush1.bf16.msra.mxu0 %v1400
    %1613 = vmatprep.subr.bf16.mxu0 0
    %1614 = vmatpush1.bf16.msra.mxu0 %v1399
    %1615 = vmatprep.subr.bf16.mxu0 0
    %1616 = vmatpush2.bf16.msra.mxu0 %v1414
    %1617 = vmatprep.subr.bf16.mxu0 0
    %1618 = vmatpush2.bf16.msra.mxu0 %v1413
    %1619 = vmatprep.subr.bf16.mxu0 0
    %1620 = vmatpush2.bf16.msra.mxu0 %v1412
    %1621 = vmatprep.subr.bf16.mxu0 0
    %1622 = vmatpush2.bf16.msra.mxu0 %v1411
    %1623 = vmatprep.subr.bf16.mxu0 0
    %1624 = vmatpush2.bf16.msra.mxu0 %v1410
    %1625 = vmatprep.subr.bf16.mxu0 0
    %1626 = vmatpush2.bf16.msra.mxu0 %v1409
    %1627 = vmatprep.subr.bf16.mxu0 0
    %1628 = vmatpush2.bf16.msra.mxu0 %v1408
    %1629 = vmatprep.subr.bf16.mxu0 0
    %1630 = vmatpush2.bf16.msra.mxu0 %v1407
    %1631 = vmatprep.mubr.bf16.mxu0 %v1088
    %1632 = vmatmul.mubr.bf16.gmra.mxu0 %v1087
    %v1633 = vpop.f32.mrf.mxu0
    %v1634 = vadd.f32 %v1594, %v1633
    %v1635 = vpop.f32.mrf.mxu0
    %v1636 = vpop.f32.mrf.mxu0
    %v1637 = vpop.f32.mrf.mxu0
    %1638 = vdwg.mxu0
    %v1639 = vmax.f32 %v1634, 0.0
    %v1640 = vpack.c.bf16 %v1639, %v1639
    %v1642 = vlaneseq
    %v1643 = vshrl.u32 %v1642, 7
    %v1644 = vsub.s32 0, %v1643
    %v1645 = vrot.slane %v1036, %v1644
    %v1663 = vunpack.c.l.b16 %v1019
    %v1664 = vunpack.c.l.b16 %v1020
    %v1665 = vunpack.c.l.b16 %v1021
    %v1666 = vunpack.c.l.b16 %v1022
    %v1667 = vunpack.c.l.b16 %v1023
    %v1668 = vunpack.c.l.b16 %v1024
    %v1669 = vunpack.c.l.b16 %v1025
    %v1670 = vunpack.c.l.b16 %v1026
    %v1671 = vunpack.c.l.b16 %v1027
    %v1672 = vunpack.c.l.b16 %v1028
    %v1673 = vunpack.c.l.b16 %v1029
    %v1674 = vunpack.c.l.b16 %v1030
    %v1675 = vunpack.c.l.b16 %v1031
    %v1676 = vunpack.c.l.b16 %v1032
    %v1677 = vunpack.c.l.b16 %v1033
    %v1678 = vunpack.c.l.b16 %v1034
    %v1679 = vpack.c.b16 %v1664, %v1663
    %v1680 = vpack.c.b16 %v1666, %v1665
    %v1681 = vpack.c.b16 %v1668, %v1667
    %v1682 = vpack.c.b16 %v1670, %v1669
    %v1683 = vpack.c.b16 %v1672, %v1671
    %v1684 = vpack.c.b16 %v1674, %v1673
    %v1685 = vpack.c.b16 %v1676, %v1675
    %v1686 = vpack.c.b16 %v1678, %v1677
    %1695 = vmatprep.subr.bf16.mxu0 0
    %1696 = vmatpush1.bf16.msra.mxu0 %v1686
    %1697 = vmatprep.subr.bf16.mxu0 0
    %1698 = vmatpush1.bf16.msra.mxu0 %v1685
    %1699 = vmatprep.subr.bf16.mxu0 0
    %1700 = vmatpush1.bf16.msra.mxu0 %v1684
    %1701 = vmatprep.subr.bf16.mxu0 0
    %1702 = vmatpush1.bf16.msra.mxu0 %v1683
    %1703 = vmatprep.subr.bf16.mxu0 0
    %1704 = vmatpush1.bf16.msra.mxu0 %v1682
    %1705 = vmatprep.subr.bf16.mxu0 0
    %1706 = vmatpush1.bf16.msra.mxu0 %v1681
    %1707 = vmatprep.subr.bf16.mxu0 0
    %1708 = vmatpush1.bf16.msra.mxu0 %v1680
    %1709 = vmatprep.subr.bf16.mxu0 0
    %1710 = vmatpush1.bf16.msra.mxu0 %v1679
    %1711 = vmatprep.subr.bf16.mxu0 0
    %1712 = vmatpush2.bf16.msra.mxu0 0
    %1713 = vmatprep.subr.bf16.mxu0 0
    %1714 = vmatpush2.bf16.msra.mxu0 0
    %1715 = vmatprep.subr.bf16.mxu0 0
    %1716 = vmatpush2.bf16.msra.mxu0 0
    %1717 = vmatprep.subr.bf16.mxu0 0
    %1718 = vmatpush2.bf16.msra.mxu0 0
    %1719 = vmatprep.subr.bf16.mxu0 0
    %1720 = vmatpush2.bf16.msra.mxu0 0
    %1721 = vmatprep.subr.bf16.mxu0 0
    %1722 = vmatpush2.bf16.msra.mxu0 0
    %1723 = vmatprep.subr.bf16.mxu0 0
    %1724 = vmatpush2.bf16.msra.mxu0 0
    %1725 = vmatprep.subr.bf16.mxu0 0
    %1726 = vmatpush2.bf16.msra.mxu0 0
    %1727 = vmatprep.mubr.bf16.mxu0 0
    %1728 = vmatmul.mubr.bf16.gmra.mxu0 %v1640
    %v1729 = vpop.f32.mrf.mxu0
    %v1730 = vadd.f32 %v1645, %v1729
    %v1731 = vpop.f32.mrf.mxu0
    %v1732 = vpop.f32.mrf.mxu0
    %v1733 = vpop.f32.mrf.mxu0
    %1734 = vdwg.mxu0
    %s1735 = scalar_lea.vmem %s6, 2
    %1736 = vst [vmem:[%s1735] sm:$0x3] %v1730
    // Predicated region
    $region30: #{siamese_forward.1} parent=1 // pred_check
      _
    $region31: #{siamese_forward.1} parent=1 // pred_check_branch
      %1738 = sbr.rel (0) target = $region33
    $region32: #{siamese_forward.1} parent=1 // pred_region
      _
    $region33: #{siamese_forward.1} parent=1 // pred_fallthru
      _
    // Predicated region
    $region34: #{siamese_forward.1} parent=1 // pred_check
      _
    $region35: #{siamese_forward.1} parent=1 // pred_check_branch
      %1740 = sbr.rel (0) target = $region37
    $region36: #{siamese_forward.1} parent=1 // pred_region
      _
    $region37: #{siamese_forward.1} parent=1 // pred_fallthru
      _
    %1741 = vsyncpa [#allocation3], 1

</llo_original>
